<compile_context>
chip_gen: v7x
topology: tpu7x:2x2x1
jax: 0.10.0
libtpu: 0.0.40
codegen_flags: <defaults>
</compile_context>

<pallas_src>
import functools
import math

import jax
import jax.numpy as jnp
from jax.experimental import pallas as pl
from jax.experimental.pallas import tpu as pltpu


# ------------------------------ Pallas kernel --------------------------------

def _fused_mha_kernel(x_ref, win_ref, bin_ref, wout_ref, bout_ref, o_ref,
                      *, n_heads, scale):
    """Fused multi-head self-attention for a block of Bt batch elements.

    x_ref    : (Bt, L, E)  f32   batch-major activation block
    win_ref  : (E, 3E)     bf16  packed [Wq^T | Wk^T | Wv^T]
    bin_ref  : (1, 3E)     f32   packed in-projection bias
    wout_ref : (E, E)      bf16  W_out^T
    bout_ref : (1, E)      f32   out-projection bias
    o_ref    : (Bt, L, E)  f32
    """
    Bt, L, E = x_ref.shape
    hd = E // n_heads

    # ---- fused QKV in-projection: ONE (Bt*L, E) x (E, 3E) MXU matmul ---------
    x2d = x_ref[...].reshape(Bt * L, E)
    qkv = (jnp.dot(x2d.astype(jnp.bfloat16), win_ref[...],
                   preferred_element_type=jnp.float32)
           + bin_ref[...])                                     # (Bt*L, 3E) f32
    qkv = qkv.reshape(Bt, L, 3 * E)

    # ---- per-head attention (statically unrolled; n_heads is small) ---------
    # TODO(synk): for large n_heads (>=8 at ViT-Base sizes) switch this unroll
    #             to lax.fori_loop to bound live (L, L) score tiles; for large
    #             L (>~1.5k) tile the KV axis flash-style (online softmax) so
    #             per-step VMEM stays bounded on v7x (64 MiB).
    head_ctx = []
    for h in range(n_heads):
        qh = qkv[:, :, h * hd:(h + 1) * hd].astype(jnp.bfloat16)           # (Bt,L,hd)
        kh = qkv[:, :, E + h * hd:E + (h + 1) * hd].astype(jnp.bfloat16)
        vh = qkv[:, :, 2 * E + h * hd:2 * E + (h + 1) * hd].astype(jnp.bfloat16)

        # scores = (q @ k^T) * scale, batched over the Bt leading dim.
        s = jnp.einsum("bqd,bkd->bqk", qh, kh,
                       preferred_element_type=jnp.float32) * scale         # (Bt,L,L)
        m = jnp.max(s, axis=-1, keepdims=True)
        # Max-subtracted, UNNORMALIZED probabilities in (0, 1]: safe to cast to
        # bf16 for the PV matmul; normalization is applied to the much smaller
        # (L, hd) context afterwards (L*hd vs L*L elementwise multiplies).
        # TODO(synk): on v6e/v7x this exp could run in bf16 (bf16 EUP, ~2x);
        #             kept f32 so the same kernel stays correct/fast on v5e.
        p = jnp.exp(s - m)
        denom = jnp.sum(p, axis=-1, keepdims=True)                          # (Bt,L,1)

        ctx_h = jnp.einsum("bqk,bkd->bqd", p.astype(jnp.bfloat16), vh,
                           preferred_element_type=jnp.float32)              # (Bt,L,hd)
        ctx_h = ctx_h * pl.reciprocal(denom, approx=True)
        head_ctx.append(ctx_h.astype(jnp.bfloat16))

    # ---- ONE K=E out-projection matmul over a lane-dense context slab --------
    ctx = jnp.concatenate(head_ctx, axis=-1).reshape(Bt * L, E)             # bf16
    out = (jnp.dot(ctx, wout_ref[...], preferred_element_type=jnp.float32)
           + bout_ref[...])                                                 # (Bt*L,E)
    o_ref[...] = out.reshape(Bt, L, E)


# ------------------------------ spec / sizing helpers -------------------------

def _const_spec(shape):
    """BlockSpec for a grid-invariant operand: single-buffered (no pointless
    double-buffering of weights that never change across the grid)."""
    index_map = lambda n: (0,) * len(shape)
    if hasattr(pl, "Buffered"):
        try:
            return pl.BlockSpec(shape, index_map, pipeline_mode=pl.Buffered(1))
        except (TypeError, ValueError):
            pass
    return pl.BlockSpec(shape, index_map)


def _pick_block_batch(N, L):
    """Batch elements per grid step: enough rows (Bt*L ~ 256) to fill the MXU M
    dimension while tiling N exactly.
    # TODO(synk): when N is tiny (1-2) a second 'parallel' axis over head/query
    #             groups would keep both v7x TensorCores busy."""
    target = max(1, -(-256 // max(L, 1)))            # ceil(256 / L)
    divisors = [d for d in range(1, N + 1) if N % d == 0 and d <= target]
    return max(divisors) if divisors else 1


def _vmem_limit_bytes(bt, L, E):
    """Explicit scoped-VMEM budget: blocks + weights + in-kernel temporaries,
    with headroom, clamped to [4 MiB, 64 MiB] (v7x physical VMEM is 64 MiB)."""
    weights = 4 * E * E * 2 + 4 * E * 4                       # bf16 W, f32 b
    blocks = 2 * (bt * L * E * 4) * 2                         # x/out, double-buffered
    interm = bt * L * 3 * E * 4 + bt * L * L * 4 + 2 * bt * L * E * 4
    est = int(1.5 * (weights + blocks + interm))
    return min(max(est, 4 * 1024 * 1024), 64 * 1024 * 1024)


# -------------------------------- wrappers -------------------------------------

@functools.partial(jax.jit, static_argnums=(2,))
def attention_forward(xb, params, n_heads):
    """Fused attention forward on batch-major activations.

    xb: (N, L, E).  Returns (N, L, E).  This entry point contains NO transpose
    ops — in a full model, keep activations batch-major so none are needed.
    (self.q / self.k / self.v outputs are never used by the reference forward —
     dead compute — so they are omitted; the result is unchanged.)
    """
    N, L, E = xb.shape
    assert E % n_heads == 0, "embed_dim must be divisible by n_heads"
    scale = 1.0 / math.sqrt(E // n_heads)

    # One-time host-side weight packing / pre-transpose: every MXU feed inside
    # the kernel is a native [M,K]x[K,N] matmul with no in-kernel transposes.
    win_t = params["in_proj_weight"].T.astype(jnp.bfloat16)          # (E, 3E)
    bin_ = params["in_proj_bias"].reshape(1, 3 * E).astype(jnp.float32)
    wout_t = params["out_proj_weight"].T.astype(jnp.bfloat16)        # (E, E)
    bout = params["out_proj_bias"].reshape(1, E).astype(jnp.float32)

    bt = _pick_block_batch(N, L)
    grid = (N // bt,)

    cost = pl.CostEstimate(
        flops=2 * N * L * E * (4 * E) + 4 * N * L * L * E,
        transcendentals=N * n_heads * L * L,
        bytes_accessed=2 * N * L * E * 4 + 4 * E * E * 2 + 4 * E * 4,
    )

    return pl.pallas_call(
        functools.partial(_fused_mha_kernel, n_heads=n_heads, scale=scale),
        out_shape=jax.ShapeDtypeStruct((N, L, E), jnp.float32),
        grid=grid,
        in_specs=[
            pl.BlockSpec((bt, L, E), lambda n: (n, 0, 0)),
            _const_spec((E, 3 * E)),
            _const_spec((1, 3 * E)),
            _const_spec((E, E)),
            _const_spec((1, E)),
        ],
        out_specs=pl.BlockSpec((bt, L, E), lambda n: (n, 0, 0)),
        compiler_params=pltpu.CompilerParams(
            dimension_semantics=("parallel",),
            vmem_limit_bytes=_vmem_limit_bytes(bt, L, E)),
        cost_estimate=cost,
    )(xb, win_t, bin_, wout_t, bout)


def attention_forward_seq_major(x, params, n_heads):
    """(L, N, E) interface identical to the PyTorch module (batch_first=False).
    The two permutes here are layout adaptation only; in a full model keep
    activations batch-major and call attention_forward directly so no transpose
    ops surround the kernel."""
    out_b = attention_forward(jnp.transpose(x, (1, 0, 2)), params, n_heads)
    return jnp.transpose(out_b, (1, 0, 2))


# ------------------------ params + pure-JAX reference -------------------------

def init_params(key, dim):
    """Parameters mirroring the PyTorch module (all f32)."""
    ks = jax.random.split(key, 10)
    bound = 1.0 / math.sqrt(dim)

    def u(k, shape):
        return jax.random.uniform(k, shape, jnp.float32, -bound, bound)

    return {
        # nn.MultiheadAttention: packed in-projection + out-projection.
        "in_proj_weight": u(ks[0], (3 * dim, dim)),
        "in_proj_bias": u(ks[1], (3 * dim,)),
        "out_proj_weight": u(ks[2], (dim, dim)),
        "out_proj_bias": u(ks[3], (dim,)),
        # self.q / self.k / self.v Linears: present in the module, but their
        # outputs are unused by forward() (dead compute).
        "q_w": u(ks[4], (dim, dim)), "q_b": u(ks[5], (dim,)),
        "k_w": u(ks[6], (dim, dim)), "k_b": u(ks[7], (dim,)),
        "v_w": u(ks[8], (dim, dim)), "v_b": u(ks[9], (dim,)),
    }


def attention_reference(x, params, n_heads):
    """Pure-JAX f32 reference of torch.nn.MultiheadAttention(x, x, x)[0].

    x: (L, N, E) — the module's batch_first=False layout."""
    L, N, E = x.shape
    hd = E // n_heads
    qkv = x @ params["in_proj_weight"].T + params["in_proj_bias"]    # (L, N, 3E)
    q, k, v = jnp.split(qkv, 3, axis=-1)

    def split_heads(t):                                              # (N*H, L, hd)
        return t.reshape(L, N * n_heads, hd).transpose(1, 0, 2)

    qh, kh, vh = split_heads(q), split_heads(k), split_heads(v)
    s = jnp.einsum("bld,bmd->blm", qh, kh) / math.sqrt(hd)
    p = jax.nn.softmax(s, axis=-1)
    ctx = jnp.einsum("blm,bmd->bld", p, vh)                          # (N*H, L, hd)
    ctx = ctx.transpose(1, 0, 2).reshape(L, N, E)
    return ctx @ params["out_proj_weight"].T + params["out_proj_bias"]


# ---------------------------------- main --------------------------------------

if __name__ == "__main__":
    # Small config: seq L=8, batch N=2, embed E=128 (keeps the output minor dim
    # lane-dense at 128), 4 heads.  Module layout is (seq, batch, embed).
    L, N, E, HEADS = 8, 2, 128, 4
    key = jax.random.PRNGKey(0)
    kp, kx = jax.random.split(key)
    params = init_params(kp, E)
    x = jax.random.normal(kx, (L, N, E), dtype=jnp.float32)          # (L, N, E)

    # Test harness hoists the layout permute once; the kernel wrapper itself is
    # transpose-free (batch-major), as a full model would keep its activations.
    xb = jnp.transpose(x, (1, 0, 2))                                 # (N, L, E)

    out_b = attention_forward(xb, params, HEADS)
    jax.block_until_ready(out_b)
    assert out_b.shape == (N, L, E), out_b.shape

    # Sanity check vs the pure-JAX f32 reference.  Loose bound: the kernel feeds
    # the MXU bf16 operands (f32 accumulate) and uses the approximate EUP
    # reciprocal for the softmax denominator; a semantic bug (wrong head slice /
    # layout / scale) would produce O(1)-relative errors.
    ref = attention_reference(x, params, HEADS)                      # (L, N, E)
    max_err = float(jnp.max(jnp.abs(jnp.transpose(out_b, (1, 0, 2)) - ref)))
    assert max_err < 1e-1, max_err

    print("KERNEL_OK")
</pallas_src>

<mosaic_0001>
module attributes {stable_mosaic.version = 11 : i64} {
  func.func @_fused_mha_kernel(%arg0: i32, %arg1: memref<2x8x128xf32, #tpu.memory_space<vmem>>, %arg2: memref<128x384xbf16, #tpu.memory_space<vmem>>, %arg3: memref<1x384xf32, #tpu.memory_space<vmem>>, %arg4: memref<128x128xbf16, #tpu.memory_space<vmem>>, %arg5: memref<1x128xf32, #tpu.memory_space<vmem>>, %arg6: memref<2x8x128xf32, #tpu.memory_space<vmem>>) attributes {dimension_semantics = [#tpu.dimension_semantics<parallel>], iteration_bounds = array<i64: 1>, scalar_prefetch = 0 : i64, scratch_operands = 0 : i64, tpu.core_type = #tpu.core_type<tc>, window_params = [{transform_indices = @transform_0, window_bounds = array<i64: 2, 8, 128>}, {pipeline_mode = #tpu.pipeline_mode<synchronous>, transform_indices = @transform_1, window_bounds = array<i64: 128, 384>}, {pipeline_mode = #tpu.pipeline_mode<synchronous>, transform_indices = @transform_2, window_bounds = array<i64: 1, 384>}, {pipeline_mode = #tpu.pipeline_mode<synchronous>, transform_indices = @transform_3, window_bounds = array<i64: 128, 128>}, {pipeline_mode = #tpu.pipeline_mode<synchronous>, transform_indices = @transform_4, window_bounds = array<i64: 1, 128>}, {transform_indices = @transform_5, window_bounds = array<i64: 2, 8, 128>}]} {
    %c0 = arith.constant 0 : index
    %c0_0 = arith.constant 0 : index
    %c0_1 = arith.constant 0 : index
    %0 = vector.load %arg1[%c0, %c0_0, %c0_1] : memref<2x8x128xf32, #tpu.memory_space<vmem>>, vector<2x8x128xf32>
    %1 = vector.shape_cast %0 : vector<2x8x128xf32> to vector<16x128xf32>
    %2 = arith.truncf %1 : vector<16x128xf32> to vector<16x128xbf16>
    %c0_2 = arith.constant 0 : index
    %c0_3 = arith.constant 0 : index
    %3 = vector.load %arg2[%c0_2, %c0_3] : memref<128x384xbf16, #tpu.memory_space<vmem>>, vector<128x384xbf16>
    %cst = arith.constant dense<0.000000e+00> : vector<16x384xf32>
    %4 = tpu.matmul %2, %3, %cst {dimension_numbers = #tpu.dot_dimension_numbers<[1], [0], [0], [1], [0, 0, 1, 1], [], []>} : vector<16x128xbf16>, vector<128x384xbf16>, vector<16x384xf32> -> vector<16x384xf32>
    %c0_4 = arith.constant 0 : index
    %c0_5 = arith.constant 0 : index
    %5 = vector.load %arg3[%c0_4, %c0_5] : memref<1x384xf32, #tpu.memory_space<vmem>>, vector<1x384xf32>
    %6 = vector.broadcast %5 : vector<1x384xf32> to vector<16x384xf32>
    %7 = arith.addf %4, %6 : vector<16x384xf32>
    %8 = vector.shape_cast %7 : vector<16x384xf32> to vector<2x8x384xf32>
    %9 = vector.extract_strided_slice %8 {offsets = [0, 0, 0], sizes = [2, 8, 32], strides = [1, 1, 1]} : vector<2x8x384xf32> to vector<2x8x32xf32>
    %10 = arith.truncf %9 : vector<2x8x32xf32> to vector<2x8x32xbf16>
    %11 = vector.extract_strided_slice %8 {offsets = [0, 0, 128], sizes = [2, 8, 32], strides = [1, 1, 1]} : vector<2x8x384xf32> to vector<2x8x32xf32>
    %12 = arith.truncf %11 : vector<2x8x32xf32> to vector<2x8x32xbf16>
    %13 = vector.extract_strided_slice %8 {offsets = [0, 0, 256], sizes = [2, 8, 32], strides = [1, 1, 1]} : vector<2x8x384xf32> to vector<2x8x32xf32>
    %14 = arith.truncf %13 : vector<2x8x32xf32> to vector<2x8x32xbf16>
    "tpu.trace_start"() <{level = 10 : i32, message = "bqd,bkd->bqk"}> : () -> ()
    %cst_6 = arith.constant dense<0.000000e+00> : vector<2x8x8xf32>
    %15 = tpu.matmul %10, %12, %cst_6 {dimension_numbers = #tpu.dot_dimension_numbers<[2], [2], [1], [1], [0, 0, 0, 1, 1, 1], [0], [0]>} : vector<2x8x32xbf16>, vector<2x8x32xbf16>, vector<2x8x8xf32> -> vector<2x8x8xf32>
    "tpu.trace_stop"() : () -> ()
    %cst_7 = arith.constant 0.176776692 : f32
    %16 = vector.broadcast %cst_7 : f32 to vector<2x8x8xf32>
    %17 = arith.mulf %15, %16 : vector<2x8x8xf32>
    %cst_8 = arith.constant dense<0xFF800000> : vector<2x8xf32>
    %18 = vector.multi_reduction <maximumf>, %17, %cst_8 [2] : vector<2x8x8xf32> to vector<2x8xf32>
    %19 = vector.shape_cast %18 : vector<2x8xf32> to vector<2x8x1xf32>
    %20 = vector.broadcast %19 : vector<2x8x1xf32> to vector<2x8x8xf32>
    %21 = arith.subf %17, %20 : vector<2x8x8xf32>
    %22 = math.exp %21 : vector<2x8x8xf32>
    %cst_9 = arith.constant dense<0.000000e+00> : vector<2x8xf32>
    %23 = vector.multi_reduction <add>, %22, %cst_9 [2] : vector<2x8x8xf32> to vector<2x8xf32>
    %24 = vector.shape_cast %23 : vector<2x8xf32> to vector<2x8x1xf32>
    %25 = arith.truncf %22 : vector<2x8x8xf32> to vector<2x8x8xbf16>
    "tpu.trace_start"() <{level = 10 : i32, message = "bqk,bkd->bqd"}> : () -> ()
    %cst_10 = arith.constant dense<0.000000e+00> : vector<2x8x32xf32>
    %26 = tpu.matmul %25, %14, %cst_10 {dimension_numbers = #tpu.dot_dimension_numbers<[2], [1], [1], [2], [0, 0, 0, 1, 1, 2], [0], [0]>} : vector<2x8x8xbf16>, vector<2x8x32xbf16>, vector<2x8x32xf32> -> vector<2x8x32xf32>
    "tpu.trace_stop"() : () -> ()
    %27 = tpu.reciprocal %24 {approx = true} : vector<2x8x1xf32> -> vector<2x8x1xf32>
    %28 = vector.broadcast %27 : vector<2x8x1xf32> to vector<2x8x32xf32>
    %29 = arith.mulf %26, %28 : vector<2x8x32xf32>
    %30 = arith.truncf %29 : vector<2x8x32xf32> to vector<2x8x32xbf16>
    %31 = vector.extract_strided_slice %8 {offsets = [0, 0, 32], sizes = [2, 8, 32], strides = [1, 1, 1]} : vector<2x8x384xf32> to vector<2x8x32xf32>
    %32 = arith.truncf %31 : vector<2x8x32xf32> to vector<2x8x32xbf16>
    %33 = vector.extract_strided_slice %8 {offsets = [0, 0, 160], sizes = [2, 8, 32], strides = [1, 1, 1]} : vector<2x8x384xf32> to vector<2x8x32xf32>
    %34 = arith.truncf %33 : vector<2x8x32xf32> to vector<2x8x32xbf16>
    %35 = vector.extract_strided_slice %8 {offsets = [0, 0, 288], sizes = [2, 8, 32], strides = [1, 1, 1]} : vector<2x8x384xf32> to vector<2x8x32xf32>
    %36 = arith.truncf %35 : vector<2x8x32xf32> to vector<2x8x32xbf16>
    "tpu.trace_start"() <{level = 10 : i32, message = "bqd,bkd->bqk"}> : () -> ()
    %cst_11 = arith.constant dense<0.000000e+00> : vector<2x8x8xf32>
    %37 = tpu.matmul %32, %34, %cst_11 {dimension_numbers = #tpu.dot_dimension_numbers<[2], [2], [1], [1], [0, 0, 0, 1, 1, 1], [0], [0]>} : vector<2x8x32xbf16>, vector<2x8x32xbf16>, vector<2x8x8xf32> -> vector<2x8x8xf32>
    "tpu.trace_stop"() : () -> ()
    %cst_12 = arith.constant 0.176776692 : f32
    %38 = vector.broadcast %cst_12 : f32 to vector<2x8x8xf32>
    %39 = arith.mulf %37, %38 : vector<2x8x8xf32>
    %cst_13 = arith.constant dense<0xFF800000> : vector<2x8xf32>
    %40 = vector.multi_reduction <maximumf>, %39, %cst_13 [2] : vector<2x8x8xf32> to vector<2x8xf32>
    %41 = vector.shape_cast %40 : vector<2x8xf32> to vector<2x8x1xf32>
    %42 = vector.broadcast %41 : vector<2x8x1xf32> to vector<2x8x8xf32>
    %43 = arith.subf %39, %42 : vector<2x8x8xf32>
    %44 = math.exp %43 : vector<2x8x8xf32>
    %cst_14 = arith.constant dense<0.000000e+00> : vector<2x8xf32>
    %45 = vector.multi_reduction <add>, %44, %cst_14 [2] : vector<2x8x8xf32> to vector<2x8xf32>
    %46 = vector.shape_cast %45 : vector<2x8xf32> to vector<2x8x1xf32>
    %47 = arith.truncf %44 : vector<2x8x8xf32> to vector<2x8x8xbf16>
    "tpu.trace_start"() <{level = 10 : i32, message = "bqk,bkd->bqd"}> : () -> ()
    %cst_15 = arith.constant dense<0.000000e+00> : vector<2x8x32xf32>
    %48 = tpu.matmul %47, %36, %cst_15 {dimension_numbers = #tpu.dot_dimension_numbers<[2], [1], [1], [2], [0, 0, 0, 1, 1, 2], [0], [0]>} : vector<2x8x8xbf16>, vector<2x8x32xbf16>, vector<2x8x32xf32> -> vector<2x8x32xf32>
    "tpu.trace_stop"() : () -> ()
    %49 = tpu.reciprocal %46 {approx = true} : vector<2x8x1xf32> -> vector<2x8x1xf32>
    %50 = vector.broadcast %49 : vector<2x8x1xf32> to vector<2x8x32xf32>
    %51 = arith.mulf %48, %50 : vector<2x8x32xf32>
    %52 = arith.truncf %51 : vector<2x8x32xf32> to vector<2x8x32xbf16>
    %53 = vector.extract_strided_slice %8 {offsets = [0, 0, 64], sizes = [2, 8, 32], strides = [1, 1, 1]} : vector<2x8x384xf32> to vector<2x8x32xf32>
    %54 = arith.truncf %53 : vector<2x8x32xf32> to vector<2x8x32xbf16>
    %55 = vector.extract_strided_slice %8 {offsets = [0, 0, 192], sizes = [2, 8, 32], strides = [1, 1, 1]} : vector<2x8x384xf32> to vector<2x8x32xf32>
    %56 = arith.truncf %55 : vector<2x8x32xf32> to vector<2x8x32xbf16>
    %57 = vector.extract_strided_slice %8 {offsets = [0, 0, 320], sizes = [2, 8, 32], strides = [1, 1, 1]} : vector<2x8x384xf32> to vector<2x8x32xf32>
    %58 = arith.truncf %57 : vector<2x8x32xf32> to vector<2x8x32xbf16>
    "tpu.trace_start"() <{level = 10 : i32, message = "bqd,bkd->bqk"}> : () -> ()
    %cst_16 = arith.constant dense<0.000000e+00> : vector<2x8x8xf32>
    %59 = tpu.matmul %54, %56, %cst_16 {dimension_numbers = #tpu.dot_dimension_numbers<[2], [2], [1], [1], [0, 0, 0, 1, 1, 1], [0], [0]>} : vector<2x8x32xbf16>, vector<2x8x32xbf16>, vector<2x8x8xf32> -> vector<2x8x8xf32>
    "tpu.trace_stop"() : () -> ()
    %cst_17 = arith.constant 0.176776692 : f32
    %60 = vector.broadcast %cst_17 : f32 to vector<2x8x8xf32>
    %61 = arith.mulf %59, %60 : vector<2x8x8xf32>
    %cst_18 = arith.constant dense<0xFF800000> : vector<2x8xf32>
    %62 = vector.multi_reduction <maximumf>, %61, %cst_18 [2] : vector<2x8x8xf32> to vector<2x8xf32>
    %63 = vector.shape_cast %62 : vector<2x8xf32> to vector<2x8x1xf32>
    %64 = vector.broadcast %63 : vector<2x8x1xf32> to vector<2x8x8xf32>
    %65 = arith.subf %61, %64 : vector<2x8x8xf32>
    %66 = math.exp %65 : vector<2x8x8xf32>
    %cst_19 = arith.constant dense<0.000000e+00> : vector<2x8xf32>
    %67 = vector.multi_reduction <add>, %66, %cst_19 [2] : vector<2x8x8xf32> to vector<2x8xf32>
    %68 = vector.shape_cast %67 : vector<2x8xf32> to vector<2x8x1xf32>
    %69 = arith.truncf %66 : vector<2x8x8xf32> to vector<2x8x8xbf16>
    "tpu.trace_start"() <{level = 10 : i32, message = "bqk,bkd->bqd"}> : () -> ()
    %cst_20 = arith.constant dense<0.000000e+00> : vector<2x8x32xf32>
    %70 = tpu.matmul %69, %58, %cst_20 {dimension_numbers = #tpu.dot_dimension_numbers<[2], [1], [1], [2], [0, 0, 0, 1, 1, 2], [0], [0]>} : vector<2x8x8xbf16>, vector<2x8x32xbf16>, vector<2x8x32xf32> -> vector<2x8x32xf32>
    "tpu.trace_stop"() : () -> ()
    %71 = tpu.reciprocal %68 {approx = true} : vector<2x8x1xf32> -> vector<2x8x1xf32>
    %72 = vector.broadcast %71 : vector<2x8x1xf32> to vector<2x8x32xf32>
    %73 = arith.mulf %70, %72 : vector<2x8x32xf32>
    %74 = arith.truncf %73 : vector<2x8x32xf32> to vector<2x8x32xbf16>
    %75 = vector.extract_strided_slice %8 {offsets = [0, 0, 96], sizes = [2, 8, 32], strides = [1, 1, 1]} : vector<2x8x384xf32> to vector<2x8x32xf32>
    %76 = arith.truncf %75 : vector<2x8x32xf32> to vector<2x8x32xbf16>
    %77 = vector.extract_strided_slice %8 {offsets = [0, 0, 224], sizes = [2, 8, 32], strides = [1, 1, 1]} : vector<2x8x384xf32> to vector<2x8x32xf32>
    %78 = arith.truncf %77 : vector<2x8x32xf32> to vector<2x8x32xbf16>
    %79 = vector.extract_strided_slice %8 {offsets = [0, 0, 352], sizes = [2, 8, 32], strides = [1, 1, 1]} : vector<2x8x384xf32> to vector<2x8x32xf32>
    %80 = arith.truncf %79 : vector<2x8x32xf32> to vector<2x8x32xbf16>
    "tpu.trace_start"() <{level = 10 : i32, message = "bqd,bkd->bqk"}> : () -> ()
    %cst_21 = arith.constant dense<0.000000e+00> : vector<2x8x8xf32>
    %81 = tpu.matmul %76, %78, %cst_21 {dimension_numbers = #tpu.dot_dimension_numbers<[2], [2], [1], [1], [0, 0, 0, 1, 1, 1], [0], [0]>} : vector<2x8x32xbf16>, vector<2x8x32xbf16>, vector<2x8x8xf32> -> vector<2x8x8xf32>
    "tpu.trace_stop"() : () -> ()
    %cst_22 = arith.constant 0.176776692 : f32
    %82 = vector.broadcast %cst_22 : f32 to vector<2x8x8xf32>
    %83 = arith.mulf %81, %82 : vector<2x8x8xf32>
    %cst_23 = arith.constant dense<0xFF800000> : vector<2x8xf32>
    %84 = vector.multi_reduction <maximumf>, %83, %cst_23 [2] : vector<2x8x8xf32> to vector<2x8xf32>
    %85 = vector.shape_cast %84 : vector<2x8xf32> to vector<2x8x1xf32>
    %86 = vector.broadcast %85 : vector<2x8x1xf32> to vector<2x8x8xf32>
    %87 = arith.subf %83, %86 : vector<2x8x8xf32>
    %88 = math.exp %87 : vector<2x8x8xf32>
    %cst_24 = arith.constant dense<0.000000e+00> : vector<2x8xf32>
    %89 = vector.multi_reduction <add>, %88, %cst_24 [2] : vector<2x8x8xf32> to vector<2x8xf32>
    %90 = vector.shape_cast %89 : vector<2x8xf32> to vector<2x8x1xf32>
    %91 = arith.truncf %88 : vector<2x8x8xf32> to vector<2x8x8xbf16>
    "tpu.trace_start"() <{level = 10 : i32, message = "bqk,bkd->bqd"}> : () -> ()
    %cst_25 = arith.constant dense<0.000000e+00> : vector<2x8x32xf32>
    %92 = tpu.matmul %91, %80, %cst_25 {dimension_numbers = #tpu.dot_dimension_numbers<[2], [1], [1], [2], [0, 0, 0, 1, 1, 2], [0], [0]>} : vector<2x8x8xbf16>, vector<2x8x32xbf16>, vector<2x8x32xf32> -> vector<2x8x32xf32>
    "tpu.trace_stop"() : () -> ()
    %93 = tpu.reciprocal %90 {approx = true} : vector<2x8x1xf32> -> vector<2x8x1xf32>
    %94 = vector.broadcast %93 : vector<2x8x1xf32> to vector<2x8x32xf32>
    %95 = arith.mulf %92, %94 : vector<2x8x32xf32>
    %96 = arith.truncf %95 : vector<2x8x32xf32> to vector<2x8x32xbf16>
    %97 = tpu.concatenate %30, %52, %74, %96 in 2 : vector<2x8x32xbf16>, vector<2x8x32xbf16>, vector<2x8x32xbf16>, vector<2x8x32xbf16> -> vector<2x8x128xbf16>
    %98 = vector.shape_cast %97 : vector<2x8x128xbf16> to vector<16x128xbf16>
    %c0_26 = arith.constant 0 : index
    %c0_27 = arith.constant 0 : index
    %99 = vector.load %arg4[%c0_26, %c0_27] : memref<128x128xbf16, #tpu.memory_space<vmem>>, vector<128x128xbf16>
    %cst_28 = arith.constant dense<0.000000e+00> : vector<16x128xf32>
    %100 = tpu.matmul %98, %99, %cst_28 {dimension_numbers = #tpu.dot_dimension_numbers<[1], [0], [0], [1], [0, 0, 1, 1], [], []>} : vector<16x128xbf16>, vector<128x128xbf16>, vector<16x128xf32> -> vector<16x128xf32>
    %c0_29 = arith.constant 0 : index
    %c0_30 = arith.constant 0 : index
    %101 = vector.load %arg5[%c0_29, %c0_30] : memref<1x128xf32, #tpu.memory_space<vmem>>, vector<1x128xf32>
    %102 = vector.broadcast %101 : vector<1x128xf32> to vector<16x128xf32>
    %103 = arith.addf %100, %102 : vector<16x128xf32>
    %104 = vector.shape_cast %103 : vector<16x128xf32> to vector<2x8x128xf32>
    %c0_31 = arith.constant 0 : index
    %c0_32 = arith.constant 0 : index
    %c0_33 = arith.constant 0 : index
    %105 = vector.load %arg6[%c0_31, %c0_32, %c0_33] : memref<2x8x128xf32, #tpu.memory_space<vmem>>, vector<2x8x128xf32>
    tpu.vector_store %arg6[%c0_31, %c0_32, %c0_33], %104 {strides = array<i32>} : memref<2x8x128xf32, #tpu.memory_space<vmem>>, vector<2x8x128xf32>,
    return
  }
  func.func @transform_0(%arg0: i32) -> (i32, i32, i32) {
    %c0_i32 = arith.constant 0 : i32
    %c0_i32_0 = arith.constant 0 : i32
    %c0_i32_1 = arith.constant 0 : i32
    return %arg0, %c0_i32, %c0_i32_0 : i32, i32, i32
  }
  func.func @transform_1(%arg0: i32) -> (i32, i32) {
    %c0_i32 = arith.constant 0 : i32
    %c0_i32_0 = arith.constant 0 : i32
    %c0_i32_1 = arith.constant 0 : i32
    return %c0_i32, %c0_i32_0 : i32, i32
  }
  func.func @transform_2(%arg0: i32) -> (i32, i32) {
    %c0_i32 = arith.constant 0 : i32
    %c0_i32_0 = arith.constant 0 : i32
    %c0_i32_1 = arith.constant 0 : i32
    return %c0_i32, %c0_i32_0 : i32, i32
  }
  func.func @transform_3(%arg0: i32) -> (i32, i32) {
    %c0_i32 = arith.constant 0 : i32
    %c0_i32_0 = arith.constant 0 : i32
    %c0_i32_1 = arith.constant 0 : i32
    return %c0_i32, %c0_i32_0 : i32, i32
  }
  func.func @transform_4(%arg0: i32) -> (i32, i32) {
    %c0_i32 = arith.constant 0 : i32
    %c0_i32_0 = arith.constant 0 : i32
    %c0_i32_1 = arith.constant 0 : i32
    return %c0_i32, %c0_i32_0 : i32, i32
  }
  func.func @transform_5(%arg0: i32) -> (i32, i32, i32) {
    %c0_i32 = arith.constant 0 : i32
    %c0_i32_0 = arith.constant 0 : i32
    %c0_i32_1 = arith.constant 0 : i32
    return %arg0, %c0_i32, %c0_i32_0 : i32, i32, i32
  }
}

</mosaic_0001>

<llo_original>
// kernel: attention_forward.1
$region0: #{attention_forward.1}
  #allocation0 [shape = 'u32[]', space=smem, size = 0x4, offset = 0x4, fixed_abs, tag = 'smem constant byte address 0x4 - core index']
  #allocation1 [shape = 'u32[144,128]{1,0:T(1,128)}', space=vmem, size = 0x12000, scoped, tag = 'internal scratch']
  %s0 = inlined_call_operand.vmem [shape: f32[2,8,128], index: 0, kind: input, shape index: {}]
  %s1 = inlined_call_operand.vmem [shape: bf16[128,384], index: 1, kind: input, shape index: {}]
  %s2 = inlined_call_operand.vmem [shape: f32[1,384], index: 2, kind: input, shape index: {}]
  %s3 = inlined_call_operand.vmem [shape: bf16[128,128], index: 3, kind: input, shape index: {}]
  %s4 = inlined_call_operand.vmem [shape: f32[1,128], index: 4, kind: input, shape index: {}]
  %s5 = inlined_call_operand.hbm [shape: f32[2,8,128], index: 5, kind: output, shape index: {}]
  %s6 = sld [smem:[#allocation0]]
  $region30: #{attention_forward.1} parent=0
    _
  %s8 = ssub.s32 1, %s6
  %s9 = scalar_select 0, %s8, %s6
  $region1: #{attention_forward.1} parent=0
    #allocation2 [shape = 'u8[8192]{0}', space=vmem, size = 0x2000, scoped, tag = 'output window, operand 0, single buffered']
    #allocation3 [shape = 's32[1]{0}', space=sflag, size = 0x4, scoped, tag = 'scoped memory for attention_forward.1']
    %10 = vsyncpa [#allocation3], 0
    // Predicated region
    $region2: #{attention_forward.1} parent=1 // pred_check
      _
    $region3: #{attention_forward.1} parent=1 // pred_check_branch
      %12 = sbr.rel (0) target = $region5
    $region4: #{attention_forward.1} parent=1 // pred_region
      _
    $region5: #{attention_forward.1} parent=1 // pred_fallthru
      _
    // Predicated region
    $region6: #{attention_forward.1} parent=1 // pred_check
      _
    $region7: #{attention_forward.1} parent=1 // pred_check_branch
      %14 = sbr.rel (0) target = $region9
    $region8: #{attention_forward.1} parent=1 // pred_region
      _
    $region9: #{attention_forward.1} parent=1 // pred_fallthru
      _
    // Predicated region
    $region10: #{attention_forward.1} parent=1 // pred_check
      _
    $region11: #{attention_forward.1} parent=1 // pred_check_branch
      %16 = sbr.rel (0) target = $region13
    $region12: #{attention_forward.1} parent=1 // pred_region
      _
    $region13: #{attention_forward.1} parent=1 // pred_fallthru
      _
    // Predicated region
    $region14: #{attention_forward.1} parent=1 // pred_check
      _
    $region15: #{attention_forward.1} parent=1 // pred_check_branch
      %18 = sbr.rel (0) target = $region17
    $region16: #{attention_forward.1} parent=1 // pred_region
      _
    $region17: #{attention_forward.1} parent=1 // pred_fallthru
      _
    // Predicated region
    $region18: #{attention_forward.1} parent=1 // pred_check
      _
    $region19: #{attention_forward.1} parent=1 // pred_check_branch
      %20 = sbr.rel (0) target = $region21
    $region20: #{attention_forward.1} parent=1 // pred_region
      _
    $region21: #{attention_forward.1} parent=1 // pred_fallthru
      _
    %v22 = vld [vmem:[%s0] sm:$0xff]
    %v23 = vld [vmem:[%s0 + $0x8] sm:$0xff]
    %v24 = vpack.c.bf16 %v23, %v22
    %v25 = vld [vmem:[%s1] sm:$0xff]
    %v26 = vld [vmem:[%s1 + $0x8] sm:$0xf]
    %v27 = vld [vmem:[%s1 + $0xc] sm:$0xff]
    %v28 = vld [vmem:[%s1 + $0x14] sm:$0xf]
    %v29 = vld [vmem:[%s1 + $0x18] sm:$0xff]
    %v30 = vld [vmem:[%s1 + $0x20] sm:$0xf]
    %v31 = vld [vmem:[%s1 + $0x24] sm:$0xff]
    %v32 = vld [vmem:[%s1 + $0x2c] sm:$0xf]
    %v33 = vld [vmem:[%s1 + $0x30] sm:$0xff]
    %v34 = vld [vmem:[%s1 + $0x38] sm:$0xf]
    %v35 = vld [vmem:[%s1 + $0x3c] sm:$0xff]
    %v36 = vld [vmem:[%s1 + $0x44] sm:$0xf]
    %v37 = vld [vmem:[%s1 + $0x48] sm:$0xff]
    %v38 = vld [vmem:[%s1 + $0x50] sm:$0xf]
    %v39 = vld [vmem:[%s1 + $0x54] sm:$0xff]
    %v40 = vld [vmem:[%s1 + $0x5c] sm:$0xf]
    %v41 = vld [vmem:[%s1 + $0x60] sm:$0xff]
    %v42 = vld [vmem:[%s1 + $0x68] sm:$0xf]
    %v43 = vld [vmem:[%s1 + $0x6c] sm:$0xff]
    %v44 = vld [vmem:[%s1 + $0x74] sm:$0xf]
    %v45 = vld [vmem:[%s1 + $0x78] sm:$0xff]
    %v46 = vld [vmem:[%s1 + $0x80] sm:$0xf]
    %v47 = vld [vmem:[%s1 + $0x84] sm:$0xff]
    %v48 = vld [vmem:[%s1 + $0x8c] sm:$0xf]
    %v49 = vld [vmem:[%s1 + $0x90] sm:$0xff]
    %v50 = vld [vmem:[%s1 + $0x98] sm:$0xf]
    %v51 = vld [vmem:[%s1 + $0x9c] sm:$0xff]
    %v52 = vld [vmem:[%s1 + $0xa4] sm:$0xf]
    %v53 = vld [vmem:[%s1 + $0xa8] sm:$0xff]
    %v54 = vld [vmem:[%s1 + $0xb0] sm:$0xf]
    %v55 = vld [vmem:[%s1 + $0xb4] sm:$0xff]
    %v56 = vld [vmem:[%s1 + $0xbc] sm:$0xf]
    %v57 = vld [vmem:[%s2] sm:$0x7]
    %v59 = vlaneseq
    %v60 = vshrl.u32 %v59, 7
    %v61 = vsub.s32 0, %v60
    %v62 = vrot.slane %v57, %v61
    %v63 = vlaneseq
    %v64 = vshrl.u32 %v63, 7
    %v65 = vsub.s32 1, %v64
    %v66 = vrot.slane %v57, %v65
    %v67 = vlaneseq
    %v68 = vshrl.u32 %v67, 7
    %v69 = vsub.s32 2, %v68
    %v70 = vrot.slane %v57, %v69
    %v106 = vunpack.c.l.b16 %v25
    %v107 = vunpack.c.h.b16 %v25
    %v108 = vunpack.c.l.b16 %v26
    %v109 = vunpack.c.l.b16 %v27
    %v110 = vunpack.c.h.b16 %v27
    %v111 = vunpack.c.l.b16 %v28
    %v112 = vunpack.c.l.b16 %v29
    %v113 = vunpack.c.h.b16 %v29
    %v114 = vunpack.c.l.b16 %v30
    %v115 = vunpack.c.l.b16 %v31
    %v116 = vunpack.c.h.b16 %v31
    %v117 = vunpack.c.l.b16 %v32
    %v118 = vunpack.c.l.b16 %v33
    %v119 = vunpack.c.h.b16 %v33
    %v120 = vunpack.c.l.b16 %v34
    %v121 = vunpack.c.l.b16 %v35
    %v122 = vunpack.c.h.b16 %v35
    %v123 = vunpack.c.l.b16 %v36
    %v124 = vunpack.c.l.b16 %v37
    %v125 = vunpack.c.h.b16 %v37
    %v126 = vunpack.c.l.b16 %v38
    %v127 = vunpack.c.l.b16 %v39
    %v128 = vunpack.c.h.b16 %v39
    %v129 = vunpack.c.l.b16 %v40
    %v130 = vunpack.c.l.b16 %v41
    %v131 = vunpack.c.h.b16 %v41
    %v132 = vunpack.c.l.b16 %v42
    %v133 = vunpack.c.l.b16 %v43
    %v134 = vunpack.c.h.b16 %v43
    %v135 = vunpack.c.l.b16 %v44
    %v136 = vunpack.c.l.b16 %v45
    %v137 = vunpack.c.h.b16 %v45
    %v138 = vunpack.c.l.b16 %v46
    %v139 = vunpack.c.l.b16 %v47
    %v140 = vunpack.c.h.b16 %v47
    %v141 = vunpack.c.l.b16 %v48
    %v142 = vunpack.c.l.b16 %v49
    %v143 = vunpack.c.h.b16 %v49
    %v144 = vunpack.c.l.b16 %v50
    %v145 = vunpack.c.l.b16 %v51
    %v146 = vunpack.c.h.b16 %v51
    %v147 = vunpack.c.l.b16 %v52
    %v148 = vunpack.c.l.b16 %v53
    %v149 = vunpack.c.h.b16 %v53
    %v150 = vunpack.c.l.b16 %v54
    %v151 = vunpack.c.l.b16 %v55
    %v152 = vunpack.c.h.b16 %v55
    %v153 = vunpack.c.l.b16 %v56
    %v154 = vpack.c.b16 %v109, %v106
    %v155 = vpack.c.b16 %v110, %v107
    %v156 = vpack.c.b16 %v111, %v108
    %v157 = vpack.c.b16 %v115, %v112
    %v158 = vpack.c.b16 %v116, %v113
    %v159 = vpack.c.b16 %v117, %v114
    %v160 = vpack.c.b16 %v121, %v118
    %v161 = vpack.c.b16 %v122, %v119
    %v162 = vpack.c.b16 %v123, %v120
    %v163 = vpack.c.b16 %v127, %v124
    %v164 = vpack.c.b16 %v128, %v125
    %v165 = vpack.c.b16 %v129, %v126
    %v166 = vpack.c.b16 %v133, %v130
    %v167 = vpack.c.b16 %v134, %v131
    %v168 = vpack.c.b16 %v135, %v132
    %v169 = vpack.c.b16 %v139, %v136
    %v170 = vpack.c.b16 %v140, %v137
    %v171 = vpack.c.b16 %v141, %v138
    %v172 = vpack.c.b16 %v145, %v142
    %v173 = vpack.c.b16 %v146, %v143
    %v174 = vpack.c.b16 %v147, %v144
    %v175 = vpack.c.b16 %v151, %v148
    %v176 = vpack.c.b16 %v152, %v149
    %v177 = vpack.c.b16 %v153, %v150
    %202 = vmatprep.subr.bf16.mxu0 %v155
    %203 = vmatpush1.bf16.msra.mxu0 %v154
    %204 = vmatprep.subr.bf16.mxu0 %v158
    %205 = vmatpush1.bf16.msra.mxu0 %v157
    %206 = vmatprep.subr.bf16.mxu0 %v161
    %207 = vmatpush1.bf16.msra.mxu0 %v160
    %208 = vmatprep.subr.bf16.mxu0 %v164
    %209 = vmatpush1.bf16.msra.mxu0 %v163
    %210 = vmatprep.subr.bf16.mxu0 %v167
    %211 = vmatpush1.bf16.msra.mxu0 %v166
    %212 = vmatprep.subr.bf16.mxu0 %v170
    %213 = vmatpush1.bf16.msra.mxu0 %v169
    %214 = vmatprep.subr.bf16.mxu0 %v173
    %215 = vmatpush1.bf16.msra.mxu0 %v172
    %216 = vmatprep.subr.bf16.mxu0 %v176
    %217 = vmatpush1.bf16.msra.mxu0 %v175
    %218 = vmatprep.subr.bf16.mxu0 0
    %219 = vmatpush1.bf16.msra.mxu0 0
    %220 = vmatprep.subr.bf16.mxu0 0
    %221 = vmatpush1.bf16.msra.mxu0 0
    %222 = vmatprep.subr.bf16.mxu0 0
    %223 = vmatpush1.bf16.msra.mxu0 0
    %224 = vmatprep.subr.bf16.mxu0 0
    %225 = vmatpush1.bf16.msra.mxu0 0
    %226 = vmatprep.subr.bf16.mxu0 0
    %227 = vmatpush1.bf16.msra.mxu0 0
    %228 = vmatprep.subr.bf16.mxu0 0
    %229 = vmatpush1.bf16.msra.mxu0 0
    %230 = vmatprep.subr.bf16.mxu0 0
    %231 = vmatpush1.bf16.msra.mxu0 0
    %232 = vmatprep.subr.bf16.mxu0 0
    %233 = vmatpush1.bf16.msra.mxu0 0
    %234 = vmatprep.mubr.bf16.mxu0 0
    %235 = vmatmul.mubr.bf16.gmra.mrb[0].mxu0 %v24
    %v236 = vpop.f32.mrb[0].mxu0
    %v237 = vadd.f32 %v62, %v236
    %v238 = vpop.f32.mrb[0].mxu0
    %v239 = vadd.f32 %v66, %v238
    %v240 = vpop.f32.mrb[0].mxu0
    %v241 = vadd.f32 %v62, %v240
    %v242 = vpop.f32.mrb[0].mxu0
    %v243 = vadd.f32 %v66, %v242
    %244 = vdwg.mxu0
    %245 = vmatprep.subr.bf16.mxu0 0
    %246 = vmatpush1.bf16.msra.mxu0 %v156
    %247 = vmatprep.subr.bf16.mxu0 0
    %248 = vmatpush1.bf16.msra.mxu0 %v159
    %249 = vmatprep.subr.bf16.mxu0 0
    %250 = vmatpush1.bf16.msra.mxu0 %v162
    %251 = vmatprep.subr.bf16.mxu0 0
    %252 = vmatpush1.bf16.msra.mxu0 %v165
    %253 = vmatprep.subr.bf16.mxu0 0
    %254 = vmatpush1.bf16.msra.mxu0 %v168
    %255 = vmatprep.subr.bf16.mxu0 0
    %256 = vmatpush1.bf16.msra.mxu0 %v171
    %257 = vmatprep.subr.bf16.mxu0 0
    %258 = vmatpush1.bf16.msra.mxu0 %v174
    %259 = vmatprep.subr.bf16.mxu0 0
    %260 = vmatpush1.bf16.msra.mxu0 %v177
    %261 = vmatprep.subr.bf16.mxu0 0
    %262 = vmatpush1.bf16.msra.mxu0 0
    %263 = vmatprep.subr.bf16.mxu0 0
    %264 = vmatpush1.bf16.msra.mxu0 0
    %265 = vmatprep.subr.bf16.mxu0 0
    %266 = vmatpush1.bf16.msra.mxu0 0
    %267 = vmatprep.subr.bf16.mxu0 0
    %268 = vmatpush1.bf16.msra.mxu0 0
    %269 = vmatprep.subr.bf16.mxu0 0
    %270 = vmatpush1.bf16.msra.mxu0 0
    %271 = vmatprep.subr.bf16.mxu0 0
    %272 = vmatpush1.bf16.msra.mxu0 0
    %273 = vmatprep.subr.bf16.mxu0 0
    %274 = vmatpush1.bf16.msra.mxu0 0
    %275 = vmatprep.subr.bf16.mxu0 0
    %276 = vmatpush1.bf16.msra.mxu0 0
    %277 = vmatprep.mubr.bf16.mxu0 0
    %278 = vmatmul.mubr.bf16.gmra.mrb[0].mxu0 %v24
    %v279 = vpop.f32.mrb[0].mxu0
    %v280 = vadd.f32 %v70, %v279
    %v281 = vpop.f32.mrb[0].mxu0
    %v282 = vpop.f32.mrb[0].mxu0
    %v283 = vadd.f32 %v70, %v282
    %v284 = vpop.f32.mrb[0].mxu0
    %285 = vdwg.mxu0
    %v286 = vpack.c.bf16 %v237, %v237
    %v287 = vpack.c.bf16 %v241, %v241
    %v288 = vpack.c.bf16 %v239, %v239
    %v289 = vpack.c.bf16 %v243, %v243
    %v290 = vpack.c.bf16 %v280, %v280
    %v291 = vpack.c.bf16 %v283, %v283
    %vm292 = vcmask 261120
    %v294 = vsel %vm292, %v286, 0
    %v297 = vsel %vm292, %v288, 0
    %299 = vmatprep.subr.bf16.mxu0 0
    %300 = vmatpush1.bf16.xpose.msra.mxu0 %v297
    %301 = vmatprep.subr.bf16.mxu0 0
    %302 = vmatpush1.bf16.xpose.msra.mxu0 0
    %303 = vmatprep.subr.bf16.mxu0 0
    %304 = vmatpush1.bf16.xpose.msra.mxu0 0
    %305 = vmatprep.subr.bf16.mxu0 0
    %306 = vmatpush1.bf16.xpose.msra.mxu0 0
    %307 = vmatprep.subr.bf16.mxu0 0
    %308 = vmatpush1.bf16.xpose.msra.mxu0 0
    %309 = vmatprep.subr.bf16.mxu0 0
    %310 = vmatpush1.bf16.xpose.msra.mxu0 0
    %311 = vmatprep.subr.bf16.mxu0 0
    %312 = vmatpush1.bf16.xpose.msra.mxu0 0
    %313 = vmatprep.subr.bf16.mxu0 0
    %314 = vmatpush1.bf16.xpose.msra.mxu0 0
    %315 = vmatprep.subr.bf16.mxu0 0
    %316 = vmatpush1.bf16.xpose.msra.mxu0 0
    %317 = vmatprep.subr.bf16.mxu0 0
    %318 = vmatpush1.bf16.xpose.msra.mxu0 0
    %319 = vmatprep.subr.bf16.mxu0 0
    %320 = vmatpush1.bf16.xpose.msra.mxu0 0
    %321 = vmatprep.subr.bf16.mxu0 0
    %322 = vmatpush1.bf16.xpose.msra.mxu0 0
    %323 = vmatprep.subr.bf16.mxu0 0
    %324 = vmatpush1.bf16.xpose.msra.mxu0 0
    %325 = vmatprep.subr.bf16.mxu0 0
    %326 = vmatpush1.bf16.xpose.msra.mxu0 0
    %327 = vmatprep.subr.bf16.mxu0 0
    %328 = vmatpush1.bf16.xpose.msra.mxu0 0
    %329 = vmatprep.subr.bf16.mxu0 0
    %330 = vmatpush1.bf16.xpose.msra.mxu0 0
    %331 = vmatprep.mubr.bf16.mxu0 0
    %332 = vmatmul.mubr.bf16.gmra.mrb[0].mxu0 %v294
    %v333 = vpop.f32.mrb[0].mxu0
    %v334 = vadd.f32 0.0, %v333
    %v335 = vpop.f32.mrb[0].mxu0
    %v336 = vpop.f32.mrb[0].mxu0
    %v337 = vpop.f32.mrb[0].mxu0
    %338 = vdwg.mxu0
    %v340 = vsel %vm292, %v287, 0
    %v343 = vsel %vm292, %v289, 0
    %345 = vmatprep.subr.bf16.mxu0 0
    %346 = vmatpush1.bf16.xpose.msra.mxu0 %v343
    %347 = vmatprep.subr.bf16.mxu0 0
    %348 = vmatpush1.bf16.xpose.msra.mxu0 0
    %349 = vmatprep.subr.bf16.mxu0 0
    %350 = vmatpush1.bf16.xpose.msra.mxu0 0
    %351 = vmatprep.subr.bf16.mxu0 0
    %352 = vmatpush1.bf16.xpose.msra.mxu0 0
    %353 = vmatprep.subr.bf16.mxu0 0
    %354 = vmatpush1.bf16.xpose.msra.mxu0 0
    %355 = vmatprep.subr.bf16.mxu0 0
    %356 = vmatpush1.bf16.xpose.msra.mxu0 0
    %357 = vmatprep.subr.bf16.mxu0 0
    %358 = vmatpush1.bf16.xpose.msra.mxu0 0
    %359 = vmatprep.subr.bf16.mxu0 0
    %360 = vmatpush1.bf16.xpose.msra.mxu0 0
    %361 = vmatprep.subr.bf16.mxu0 0
    %362 = vmatpush1.bf16.xpose.msra.mxu0 0
    %363 = vmatprep.subr.bf16.mxu0 0
    %364 = vmatpush1.bf16.xpose.msra.mxu0 0
    %365 = vmatprep.subr.bf16.mxu0 0
    %366 = vmatpush1.bf16.xpose.msra.mxu0 0
    %367 = vmatprep.subr.bf16.mxu0 0
    %368 = vmatpush1.bf16.xpose.msra.mxu0 0
    %369 = vmatprep.subr.bf16.mxu0 0
    %370 = vmatpush1.bf16.xpose.msra.mxu0 0
    %371 = vmatprep.subr.bf16.mxu0 0
    %372 = vmatpush1.bf16.xpose.msra.mxu0 0
    %373 = vmatprep.subr.bf16.mxu0 0
    %374 = vmatpush1.bf16.xpose.msra.mxu0 0
    %375 = vmatprep.subr.bf16.mxu0 0
    %376 = vmatpush1.bf16.xpose.msra.mxu0 0
    %377 = vmatprep.mubr.bf16.mxu0 0
    %378 = vmatmul.mubr.bf16.gmra.mrb[0].mxu0 %v340
    %v379 = vpop.f32.mrb[0].mxu0
    %v380 = vadd.f32 0.0, %v379
    %v381 = vpop.f32.mrb[0].mxu0
    %v382 = vpop.f32.mrb[0].mxu0
    %v383 = vpop.f32.mrb[0].mxu0
    %384 = vdwg.mxu0
    %v385 = vmul.f32 %v334, 0.17677669
    %v386 = vmul.f32 %v380, 0.17677669
    %vm387 = vcmask 64512
    %v388 = vsel %vm387, %v385, -inf
    %389 = vmax.xlane.f32.xlu0 %v388
    %v390 = vpop.xlane.xlu0 %389
    %v391 = vsel %vm387, %v386, -inf
    %392 = vmax.xlane.f32.xlu0 %v391
    %v393 = vpop.xlane.xlu0 %392
    %v394 = vsub.f32 %v385, %v390
    %v395 = vsub.f32 %v386, %v393
    %v396 = vmul.f32 %v394, 1.442695
    %v397 = vpow.pop %v396
    %v398 = vmul.f32 %v395, 1.442695
    %v399 = vpow.pop %v398
    %v400 = vsel %vm387, %v397, 0.0
    %401 = vadd.xlane.f32.xlu0 %v400
    %v402 = vpop.xlane.xlu0 %401
    %v403 = vsel %vm387, %v399, 0.0
    %404 = vadd.xlane.f32.xlu0 %v403
    %v405 = vpop.xlane.xlu0 %404
    %v406 = vpack.c.bf16 %v397, %v397
    %v407 = vpack.c.bf16 %v399, %v399
    %v409 = vsel %vm387, %v406, 0
    %vm411 = vcmask 1043456
    %v413 = vsel %vm411, %v290, 0
    %415 = vmatprep.subr.bf16.mxu0 0
    %416 = vmatpush1.bf16.msra.mxu0 %v413
    %417 = vmatprep.subr.bf16.mxu0 0
    %418 = vmatpush1.bf16.msra.mxu0 0
    %419 = vmatprep.subr.bf16.mxu0 0
    %420 = vmatpush1.bf16.msra.mxu0 0
    %421 = vmatprep.subr.bf16.mxu0 0
    %422 = vmatpush1.bf16.msra.mxu0 0
    %423 = vmatprep.subr.bf16.mxu0 0
    %424 = vmatpush1.bf16.msra.mxu0 0
    %425 = vmatprep.subr.bf16.mxu0 0
    %426 = vmatpush1.bf16.msra.mxu0 0
    %427 = vmatprep.subr.bf16.mxu0 0
    %428 = vmatpush1.bf16.msra.mxu0 0
    %429 = vmatprep.subr.bf16.mxu0 0
    %430 = vmatpush1.bf16.msra.mxu0 0
    %431 = vmatprep.subr.bf16.mxu0 0
    %432 = vmatpush1.bf16.msra.mxu0 0
    %433 = vmatprep.subr.bf16.mxu0 0
    %434 = vmatpush1.bf16.msra.mxu0 0
    %435 = vmatprep.subr.bf16.mxu0 0
    %436 = vmatpush1.bf16.msra.mxu0 0
    %437 = vmatprep.subr.bf16.mxu0 0
    %438 = vmatpush1.bf16.msra.mxu0 0
    %439 = vmatprep.subr.bf16.mxu0 0
    %440 = vmatpush1.bf16.msra.mxu0 0
    %441 = vmatprep.subr.bf16.mxu0 0
    %442 = vmatpush1.bf16.msra.mxu0 0
    %443 = vmatprep.subr.bf16.mxu0 0
    %444 = vmatpush1.bf16.msra.mxu0 0
    %445 = vmatprep.subr.bf16.mxu0 0
    %446 = vmatpush1.bf16.msra.mxu0 0
    %447 = vmatprep.mubr.bf16.mxu0 0
    %448 = vmatmul.mubr.bf16.gmra.mrb[0].mxu0 %v409
    %v449 = vpop.f32.mrb[0].mxu0
    %v450 = vadd.f32 0.0, %v449
    %v451 = vpop.f32.mrb[0].mxu0
    %v452 = vpop.f32.mrb[0].mxu0
    %v453 = vpop.f32.mrb[0].mxu0
    %454 = vdwg.mxu0
    %v456 = vsel %vm387, %v407, 0
    %v459 = vsel %vm411, %v291, 0
    %461 = vmatprep.subr.bf16.mxu0 0
    %462 = vmatpush1.bf16.msra.mxu0 %v459
    %463 = vmatprep.subr.bf16.mxu0 0
    %464 = vmatpush1.bf16.msra.mxu0 0
    %465 = vmatprep.subr.bf16.mxu0 0
    %466 = vmatpush1.bf16.msra.mxu0 0
    %467 = vmatprep.subr.bf16.mxu0 0
    %468 = vmatpush1.bf16.msra.mxu0 0
    %469 = vmatprep.subr.bf16.mxu0 0
    %470 = vmatpush1.bf16.msra.mxu0 0
    %471 = vmatprep.subr.bf16.mxu0 0
    %472 = vmatpush1.bf16.msra.mxu0 0
    %473 = vmatprep.subr.bf16.mxu0 0
    %474 = vmatpush1.bf16.msra.mxu0 0
    %475 = vmatprep.subr.bf16.mxu0 0
    %476 = vmatpush1.bf16.msra.mxu0 0
    %477 = vmatprep.subr.bf16.mxu0 0
    %478 = vmatpush1.bf16.msra.mxu0 0
    %479 = vmatprep.subr.bf16.mxu0 0
    %480 = vmatpush1.bf16.msra.mxu0 0
    %481 = vmatprep.subr.bf16.mxu0 0
    %482 = vmatpush1.bf16.msra.mxu0 0
    %483 = vmatprep.subr.bf16.mxu0 0
    %484 = vmatpush1.bf16.msra.mxu0 0
    %485 = vmatprep.subr.bf16.mxu0 0
    %486 = vmatpush1.bf16.msra.mxu0 0
    %487 = vmatprep.subr.bf16.mxu0 0
    %488 = vmatpush1.bf16.msra.mxu0 0
    %489 = vmatprep.subr.bf16.mxu0 0
    %490 = vmatpush1.bf16.msra.mxu0 0
    %491 = vmatprep.subr.bf16.mxu0 0
    %492 = vmatpush1.bf16.msra.mxu0 0
    %493 = vmatprep.mubr.bf16.mxu0 0
    %494 = vmatmul.mubr.bf16.gmra.mrb[0].mxu0 %v456
    %v495 = vpop.f32.mrb[0].mxu0
    %v496 = vadd.f32 0.0, %v495
    %v497 = vpop.f32.mrb[0].mxu0
    %v498 = vpop.f32.mrb[0].mxu0
    %v499 = vpop.f32.mrb[0].mxu0
    %500 = vdwg.mxu0
    %v501 = vrcp.pop %v402
    %v502 = vrcp.pop %v405
    %v503 = vmul.f32 %v450, %v501
    %v504 = vmul.f32 %v496, %v502
    %v505 = vpack.c.bf16 %v503, %v503
    %v506 = vpack.c.bf16 %v504, %v504
    %508 = vrot.lane.b32.xlu0 %v286, 96
    %v509 = vpop.permute.xlu0 %508
    %511 = vrot.lane.b32.xlu0 %v288, 96
    %v512 = vpop.permute.xlu0 %511
    %v514 = vsel %vm292, %v509, 0
    %v517 = vsel %vm292, %v512, 0
    %519 = vmatprep.subr.bf16.mxu0 0
    %520 = vmatpush1.bf16.xpose.msra.mxu0 %v517
    %521 = vmatprep.subr.bf16.mxu0 0
    %522 = vmatpush1.bf16.xpose.msra.mxu0 0
    %523 = vmatprep.subr.bf16.mxu0 0
    %524 = vmatpush1.bf16.xpose.msra.mxu0 0
    %525 = vmatprep.subr.bf16.mxu0 0
    %526 = vmatpush1.bf16.xpose.msra.mxu0 0
    %527 = vmatprep.subr.bf16.mxu0 0
    %528 = vmatpush1.bf16.xpose.msra.mxu0 0
    %529 = vmatprep.subr.bf16.mxu0 0
    %530 = vmatpush1.bf16.xpose.msra.mxu0 0
    %531 = vmatprep.subr.bf16.mxu0 0
    %532 = vmatpush1.bf16.xpose.msra.mxu0 0
    %533 = vmatprep.subr.bf16.mxu0 0
    %534 = vmatpush1.bf16.xpose.msra.mxu0 0
    %535 = vmatprep.subr.bf16.mxu0 0
    %536 = vmatpush1.bf16.xpose.msra.mxu0 0
    %537 = vmatprep.subr.bf16.mxu0 0
    %538 = vmatpush1.bf16.xpose.msra.mxu0 0
    %539 = vmatprep.subr.bf16.mxu0 0
    %540 = vmatpush1.bf16.xpose.msra.mxu0 0
    %541 = vmatprep.subr.bf16.mxu0 0
    %542 = vmatpush1.bf16.xpose.msra.mxu0 0
    %543 = vmatprep.subr.bf16.mxu0 0
    %544 = vmatpush1.bf16.xpose.msra.mxu0 0
    %545 = vmatprep.subr.bf16.mxu0 0
    %546 = vmatpush1.bf16.xpose.msra.mxu0 0
    %547 = vmatprep.subr.bf16.mxu0 0
    %548 = vmatpush1.bf16.xpose.msra.mxu0 0
    %549 = vmatprep.subr.bf16.mxu0 0
    %550 = vmatpush1.bf16.xpose.msra.mxu0 0
    %551 = vmatprep.mubr.bf16.mxu0 0
    %552 = vmatmul.mubr.bf16.gmra.mrb[0].mxu0 %v514
    %v553 = vpop.f32.mrb[0].mxu0
    %v554 = vadd.f32 0.0, %v553
    %v555 = vpop.f32.mrb[0].mxu0
    %v556 = vpop.f32.mrb[0].mxu0
    %v557 = vpop.f32.mrb[0].mxu0
    %558 = vdwg.mxu0
    %560 = vrot.lane.b32.xlu0 %v287, 96
    %v561 = vpop.permute.xlu0 %560
    %563 = vrot.lane.b32.xlu0 %v289, 96
    %v564 = vpop.permute.xlu0 %563
    %v566 = vsel %vm292, %v561, 0
    %v569 = vsel %vm292, %v564, 0
    %571 = vmatprep.subr.bf16.mxu0 0
    %572 = vmatpush1.bf16.xpose.msra.mxu0 %v569
    %573 = vmatprep.subr.bf16.mxu0 0
    %574 = vmatpush1.bf16.xpose.msra.mxu0 0
    %575 = vmatprep.subr.bf16.mxu0 0
    %576 = vmatpush1.bf16.xpose.msra.mxu0 0
    %577 = vmatprep.subr.bf16.mxu0 0
    %578 = vmatpush1.bf16.xpose.msra.mxu0 0
    %579 = vmatprep.subr.bf16.mxu0 0
    %580 = vmatpush1.bf16.xpose.msra.mxu0 0
    %581 = vmatprep.subr.bf16.mxu0 0
    %582 = vmatpush1.bf16.xpose.msra.mxu0 0
    %583 = vmatprep.subr.bf16.mxu0 0
    %584 = vmatpush1.bf16.xpose.msra.mxu0 0
    %585 = vmatprep.subr.bf16.mxu0 0
    %586 = vmatpush1.bf16.xpose.msra.mxu0 0
    %587 = vmatprep.subr.bf16.mxu0 0
    %588 = vmatpush1.bf16.xpose.msra.mxu0 0
    %589 = vmatprep.subr.bf16.mxu0 0
    %590 = vmatpush1.bf16.xpose.msra.mxu0 0
    %591 = vmatprep.subr.bf16.mxu0 0
    %592 = vmatpush1.bf16.xpose.msra.mxu0 0
    %593 = vmatprep.subr.bf16.mxu0 0
    %594 = vmatpush1.bf16.xpose.msra.mxu0 0
    %595 = vmatprep.subr.bf16.mxu0 0
    %596 = vmatpush1.bf16.xpose.msra.mxu0 0
    %597 = vmatprep.subr.bf16.mxu0 0
    %598 = vmatpush1.bf16.xpose.msra.mxu0 0
    %599 = vmatprep.subr.bf16.mxu0 0
    %600 = vmatpush1.bf16.xpose.msra.mxu0 0
    %601 = vmatprep.subr.bf16.mxu0 0
    %602 = vmatpush1.bf16.xpose.msra.mxu0 0
    %603 = vmatprep.mubr.bf16.mxu0 0
    %604 = vmatmul.mubr.bf16.gmra.mrb[0].mxu0 %v566
    %v605 = vpop.f32.mrb[0].mxu0
    %v606 = vadd.f32 0.0, %v605
    %v607 = vpop.f32.mrb[0].mxu0
    %v608 = vpop.f32.mrb[0].mxu0
    %v609 = vpop.f32.mrb[0].mxu0
    %610 = vdwg.mxu0
    %v611 = vmul.f32 %v554, 0.17677669
    %v612 = vmul.f32 %v606, 0.17677669
    %v613 = vsel %vm387, %v611, -inf
    %614 = vmax.xlane.f32.xlu0 %v613
    %v615 = vpop.xlane.xlu0 %614
    %v616 = vsel %vm387, %v612, -inf
    %617 = vmax.xlane.f32.xlu0 %v616
    %v618 = vpop.xlane.xlu0 %617
    %v619 = vsub.f32 %v611, %v615
    %v620 = vsub.f32 %v612, %v618
    %v621 = vmul.f32 %v619, 1.442695
    %v622 = vpow.pop %v621
    %v623 = vmul.f32 %v620, 1.442695
    %v624 = vpow.pop %v623
    %v625 = vsel %vm387, %v622, 0.0
    %626 = vadd.xlane.f32.xlu0 %v625
    %v627 = vpop.xlane.xlu0 %626
    %v628 = vsel %vm387, %v624, 0.0
    %629 = vadd.xlane.f32.xlu0 %v628
    %v630 = vpop.xlane.xlu0 %629
    %v631 = vpack.c.bf16 %v622, %v622
    %v632 = vpack.c.bf16 %v624, %v624
    %634 = vrot.lane.b32.xlu0 %v290, 96
    %v635 = vpop.permute.xlu0 %634
    %v637 = vsel %vm387, %v631, 0
    %v640 = vsel %vm411, %v635, 0
    %642 = vmatprep.subr.bf16.mxu0 0
    %643 = vmatpush1.bf16.msra.mxu0 %v640
    %644 = vmatprep.subr.bf16.mxu0 0
    %645 = vmatpush1.bf16.msra.mxu0 0
    %646 = vmatprep.subr.bf16.mxu0 0
    %647 = vmatpush1.bf16.msra.mxu0 0
    %648 = vmatprep.subr.bf16.mxu0 0
    %649 = vmatpush1.bf16.msra.mxu0 0
    %650 = vmatprep.subr.bf16.mxu0 0
    %651 = vmatpush1.bf16.msra.mxu0 0
    %652 = vmatprep.subr.bf16.mxu0 0
    %653 = vmatpush1.bf16.msra.mxu0 0
    %654 = vmatprep.subr.bf16.mxu0 0
    %655 = vmatpush1.bf16.msra.mxu0 0
    %656 = vmatprep.subr.bf16.mxu0 0
    %657 = vmatpush1.bf16.msra.mxu0 0
    %658 = vmatprep.subr.bf16.mxu0 0
    %659 = vmatpush1.bf16.msra.mxu0 0
    %660 = vmatprep.subr.bf16.mxu0 0
    %661 = vmatpush1.bf16.msra.mxu0 0
    %662 = vmatprep.subr.bf16.mxu0 0
    %663 = vmatpush1.bf16.msra.mxu0 0
    %664 = vmatprep.subr.bf16.mxu0 0
    %665 = vmatpush1.bf16.msra.mxu0 0
    %666 = vmatprep.subr.bf16.mxu0 0
    %667 = vmatpush1.bf16.msra.mxu0 0
    %668 = vmatprep.subr.bf16.mxu0 0
    %669 = vmatpush1.bf16.msra.mxu0 0
    %670 = vmatprep.subr.bf16.mxu0 0
    %671 = vmatpush1.bf16.msra.mxu0 0
    %672 = vmatprep.subr.bf16.mxu0 0
    %673 = vmatpush1.bf16.msra.mxu0 0
    %674 = vmatprep.mubr.bf16.mxu0 0
    %675 = vmatmul.mubr.bf16.gmra.mrb[0].mxu0 %v637
    %v676 = vpop.f32.mrb[0].mxu0
    %v677 = vadd.f32 0.0, %v676
    %v678 = vpop.f32.mrb[0].mxu0
    %v679 = vpop.f32.mrb[0].mxu0
    %v680 = vpop.f32.mrb[0].mxu0
    %681 = vdwg.mxu0
    %683 = vrot.lane.b32.xlu0 %v291, 96
    %v684 = vpop.permute.xlu0 %683
    %v686 = vsel %vm387, %v632, 0
    %v689 = vsel %vm411, %v684, 0
    %691 = vmatprep.subr.bf16.mxu0 0
    %692 = vmatpush1.bf16.msra.mxu0 %v689
    %693 = vmatprep.subr.bf16.mxu0 0
    %694 = vmatpush1.bf16.msra.mxu0 0
    %695 = vmatprep.subr.bf16.mxu0 0
    %696 = vmatpush1.bf16.msra.mxu0 0
    %697 = vmatprep.subr.bf16.mxu0 0
    %698 = vmatpush1.bf16.msra.mxu0 0
    %699 = vmatprep.subr.bf16.mxu0 0
    %700 = vmatpush1.bf16.msra.mxu0 0
    %701 = vmatprep.subr.bf16.mxu0 0
    %702 = vmatpush1.bf16.msra.mxu0 0
    %703 = vmatprep.subr.bf16.mxu0 0
    %704 = vmatpush1.bf16.msra.mxu0 0
    %705 = vmatprep.subr.bf16.mxu0 0
    %706 = vmatpush1.bf16.msra.mxu0 0
    %707 = vmatprep.subr.bf16.mxu0 0
    %708 = vmatpush1.bf16.msra.mxu0 0
    %709 = vmatprep.subr.bf16.mxu0 0
    %710 = vmatpush1.bf16.msra.mxu0 0
    %711 = vmatprep.subr.bf16.mxu0 0
    %712 = vmatpush1.bf16.msra.mxu0 0
    %713 = vmatprep.subr.bf16.mxu0 0
    %714 = vmatpush1.bf16.msra.mxu0 0
    %715 = vmatprep.subr.bf16.mxu0 0
    %716 = vmatpush1.bf16.msra.mxu0 0
    %717 = vmatprep.subr.bf16.mxu0 0
    %718 = vmatpush1.bf16.msra.mxu0 0
    %719 = vmatprep.subr.bf16.mxu0 0
    %720 = vmatpush1.bf16.msra.mxu0 0
    %721 = vmatprep.subr.bf16.mxu0 0
    %722 = vmatpush1.bf16.msra.mxu0 0
    %723 = vmatprep.mubr.bf16.mxu0 0
    %724 = vmatmul.mubr.bf16.gmra.mrb[0].mxu0 %v686
    %v725 = vpop.f32.mrb[0].mxu0
    %v726 = vadd.f32 0.0, %v725
    %v727 = vpop.f32.mrb[0].mxu0
    %v728 = vpop.f32.mrb[0].mxu0
    %v729 = vpop.f32.mrb[0].mxu0
    %730 = vdwg.mxu0
    %v731 = vrcp.pop %v627
    %v732 = vrcp.pop %v630
    %v733 = vmul.f32 %v677, %v731
    %v734 = vmul.f32 %v726, %v732
    %v735 = vpack.c.bf16 %v733, %v733
    %v736 = vpack.c.bf16 %v734, %v734
    %737 = vrot.lane.b32.xlu0 %v286, 64
    %v738 = vpop.permute.xlu0 %737
    %739 = vrot.lane.b32.xlu0 %v288, 64
    %v740 = vpop.permute.xlu0 %739
    %v742 = vsel %vm292, %v738, 0
    %v745 = vsel %vm292, %v740, 0
    %747 = vmatprep.subr.bf16.mxu0 0
    %748 = vmatpush1.bf16.xpose.msra.mxu0 %v745
    %749 = vmatprep.subr.bf16.mxu0 0
    %750 = vmatpush1.bf16.xpose.msra.mxu0 0
    %751 = vmatprep.subr.bf16.mxu0 0
    %752 = vmatpush1.bf16.xpose.msra.mxu0 0
    %753 = vmatprep.subr.bf16.mxu0 0
    %754 = vmatpush1.bf16.xpose.msra.mxu0 0
    %755 = vmatprep.subr.bf16.mxu0 0
    %756 = vmatpush1.bf16.xpose.msra.mxu0 0
    %757 = vmatprep.subr.bf16.mxu0 0
    %758 = vmatpush1.bf16.xpose.msra.mxu0 0
    %759 = vmatprep.subr.bf16.mxu0 0
    %760 = vmatpush1.bf16.xpose.msra.mxu0 0
    %761 = vmatprep.subr.bf16.mxu0 0
    %762 = vmatpush1.bf16.xpose.msra.mxu0 0
    %763 = vmatprep.subr.bf16.mxu0 0
    %764 = vmatpush1.bf16.xpose.msra.mxu0 0
    %765 = vmatprep.subr.bf16.mxu0 0
    %766 = vmatpush1.bf16.xpose.msra.mxu0 0
    %767 = vmatprep.subr.bf16.mxu0 0
    %768 = vmatpush1.bf16.xpose.msra.mxu0 0
    %769 = vmatprep.subr.bf16.mxu0 0
    %770 = vmatpush1.bf16.xpose.msra.mxu0 0
    %771 = vmatprep.subr.bf16.mxu0 0
    %772 = vmatpush1.bf16.xpose.msra.mxu0 0
    %773 = vmatprep.subr.bf16.mxu0 0
    %774 = vmatpush1.bf16.xpose.msra.mxu0 0
    %775 = vmatprep.subr.bf16.mxu0 0
    %776 = vmatpush1.bf16.xpose.msra.mxu0 0
    %777 = vmatprep.subr.bf16.mxu0 0
    %778 = vmatpush1.bf16.xpose.msra.mxu0 0
    %779 = vmatprep.mubr.bf16.mxu0 0
    %780 = vmatmul.mubr.bf16.gmra.mrb[0].mxu0 %v742
    %v781 = vpop.f32.mrb[0].mxu0
    %v782 = vadd.f32 0.0, %v781
    %v783 = vpop.f32.mrb[0].mxu0
    %v784 = vpop.f32.mrb[0].mxu0
    %v785 = vpop.f32.mrb[0].mxu0
    %786 = vdwg.mxu0
    %787 = vrot.lane.b32.xlu0 %v287, 64
    %v788 = vpop.permute.xlu0 %787
    %789 = vrot.lane.b32.xlu0 %v289, 64
    %v790 = vpop.permute.xlu0 %789
    %v792 = vsel %vm292, %v788, 0
    %v795 = vsel %vm292, %v790, 0
    %797 = vmatprep.subr.bf16.mxu0 0
    %798 = vmatpush1.bf16.xpose.msra.mxu0 %v795
    %799 = vmatprep.subr.bf16.mxu0 0
    %800 = vmatpush1.bf16.xpose.msra.mxu0 0
    %801 = vmatprep.subr.bf16.mxu0 0
    %802 = vmatpush1.bf16.xpose.msra.mxu0 0
    %803 = vmatprep.subr.bf16.mxu0 0
    %804 = vmatpush1.bf16.xpose.msra.mxu0 0
    %805 = vmatprep.subr.bf16.mxu0 0
    %806 = vmatpush1.bf16.xpose.msra.mxu0 0
    %807 = vmatprep.subr.bf16.mxu0 0
    %808 = vmatpush1.bf16.xpose.msra.mxu0 0
    %809 = vmatprep.subr.bf16.mxu0 0
    %810 = vmatpush1.bf16.xpose.msra.mxu0 0
    %811 = vmatprep.subr.bf16.mxu0 0
    %812 = vmatpush1.bf16.xpose.msra.mxu0 0
    %813 = vmatprep.subr.bf16.mxu0 0
    %814 = vmatpush1.bf16.xpose.msra.mxu0 0
    %815 = vmatprep.subr.bf16.mxu0 0
    %816 = vmatpush1.bf16.xpose.msra.mxu0 0
    %817 = vmatprep.subr.bf16.mxu0 0
    %818 = vmatpush1.bf16.xpose.msra.mxu0 0
    %819 = vmatprep.subr.bf16.mxu0 0
    %820 = vmatpush1.bf16.xpose.msra.mxu0 0
    %821 = vmatprep.subr.bf16.mxu0 0
    %822 = vmatpush1.bf16.xpose.msra.mxu0 0
    %823 = vmatprep.subr.bf16.mxu0 0
    %824 = vmatpush1.bf16.xpose.msra.mxu0 0
    %825 = vmatprep.subr.bf16.mxu0 0
    %826 = vmatpush1.bf16.xpose.msra.mxu0 0
    %827 = vmatprep.subr.bf16.mxu0 0
    %828 = vmatpush1.bf16.xpose.msra.mxu0 0
    %829 = vmatprep.mubr.bf16.mxu0 0
    %830 = vmatmul.mubr.bf16.gmra.mrb[0].mxu0 %v792
    %v831 = vpop.f32.mrb[0].mxu0
    %v832 = vadd.f32 0.0, %v831
    %v833 = vpop.f32.mrb[0].mxu0
    %v834 = vpop.f32.mrb[0].mxu0
    %v835 = vpop.f32.mrb[0].mxu0
    %836 = vdwg.mxu0
    %v837 = vmul.f32 %v782, 0.17677669
    %v838 = vmul.f32 %v832, 0.17677669
    %v839 = vsel %vm387, %v837, -inf
    %840 = vmax.xlane.f32.xlu0 %v839
    %v841 = vpop.xlane.xlu0 %840
    %v842 = vsel %vm387, %v838, -inf
    %843 = vmax.xlane.f32.xlu0 %v842
    %v844 = vpop.xlane.xlu0 %843
    %v845 = vsub.f32 %v837, %v841
    %v846 = vsub.f32 %v838, %v844
    %v847 = vmul.f32 %v845, 1.442695
    %v848 = vpow.pop %v847
    %v849 = vmul.f32 %v846, 1.442695
    %v850 = vpow.pop %v849
    %v851 = vsel %vm387, %v848, 0.0
    %852 = vadd.xlane.f32.xlu0 %v851
    %v853 = vpop.xlane.xlu0 %852
    %v854 = vsel %vm387, %v850, 0.0
    %855 = vadd.xlane.f32.xlu0 %v854
    %v856 = vpop.xlane.xlu0 %855
    %v857 = vpack.c.bf16 %v848, %v848
    %v858 = vpack.c.bf16 %v850, %v850
    %859 = vrot.lane.b32.xlu0 %v290, 64
    %v860 = vpop.permute.xlu0 %859
    %v862 = vsel %vm387, %v857, 0
    %v865 = vsel %vm411, %v860, 0
    %867 = vmatprep.subr.bf16.mxu0 0
    %868 = vmatpush1.bf16.msra.mxu0 %v865
    %869 = vmatprep.subr.bf16.mxu0 0
    %870 = vmatpush1.bf16.msra.mxu0 0
    %871 = vmatprep.subr.bf16.mxu0 0
    %872 = vmatpush1.bf16.msra.mxu0 0
    %873 = vmatprep.subr.bf16.mxu0 0
    %874 = vmatpush1.bf16.msra.mxu0 0
    %875 = vmatprep.subr.bf16.mxu0 0
    %876 = vmatpush1.bf16.msra.mxu0 0
    %877 = vmatprep.subr.bf16.mxu0 0
    %878 = vmatpush1.bf16.msra.mxu0 0
    %879 = vmatprep.subr.bf16.mxu0 0
    %880 = vmatpush1.bf16.msra.mxu0 0
    %881 = vmatprep.subr.bf16.mxu0 0
    %882 = vmatpush1.bf16.msra.mxu0 0
    %883 = vmatprep.subr.bf16.mxu0 0
    %884 = vmatpush1.bf16.msra.mxu0 0
    %885 = vmatprep.subr.bf16.mxu0 0
    %886 = vmatpush1.bf16.msra.mxu0 0
    %887 = vmatprep.subr.bf16.mxu0 0
    %888 = vmatpush1.bf16.msra.mxu0 0
    %889 = vmatprep.subr.bf16.mxu0 0
    %890 = vmatpush1.bf16.msra.mxu0 0
    %891 = vmatprep.subr.bf16.mxu0 0
    %892 = vmatpush1.bf16.msra.mxu0 0
    %893 = vmatprep.subr.bf16.mxu0 0
    %894 = vmatpush1.bf16.msra.mxu0 0
    %895 = vmatprep.subr.bf16.mxu0 0
    %896 = vmatpush1.bf16.msra.mxu0 0
    %897 = vmatprep.subr.bf16.mxu0 0
    %898 = vmatpush1.bf16.msra.mxu0 0
    %899 = vmatprep.mubr.bf16.mxu0 0
    %900 = vmatmul.mubr.bf16.gmra.mrb[0].mxu0 %v862
    %v901 = vpop.f32.mrb[0].mxu0
    %v902 = vadd.f32 0.0, %v901
    %v903 = vpop.f32.mrb[0].mxu0
    %v904 = vpop.f32.mrb[0].mxu0
    %v905 = vpop.f32.mrb[0].mxu0
    %906 = vdwg.mxu0
    %907 = vrot.lane.b32.xlu0 %v291, 64
    %v908 = vpop.permute.xlu0 %907
    %v910 = vsel %vm387, %v858, 0
    %v913 = vsel %vm411, %v908, 0
    %915 = vmatprep.subr.bf16.mxu0 0
    %916 = vmatpush1.bf16.msra.mxu0 %v913
    %917 = vmatprep.subr.bf16.mxu0 0
    %918 = vmatpush1.bf16.msra.mxu0 0
    %919 = vmatprep.subr.bf16.mxu0 0
    %920 = vmatpush1.bf16.msra.mxu0 0
    %921 = vmatprep.subr.bf16.mxu0 0
    %922 = vmatpush1.bf16.msra.mxu0 0
    %923 = vmatprep.subr.bf16.mxu0 0
    %924 = vmatpush1.bf16.msra.mxu0 0
    %925 = vmatprep.subr.bf16.mxu0 0
    %926 = vmatpush1.bf16.msra.mxu0 0
    %927 = vmatprep.subr.bf16.mxu0 0
    %928 = vmatpush1.bf16.msra.mxu0 0
    %929 = vmatprep.subr.bf16.mxu0 0
    %930 = vmatpush1.bf16.msra.mxu0 0
    %931 = vmatprep.subr.bf16.mxu0 0
    %932 = vmatpush1.bf16.msra.mxu0 0
    %933 = vmatprep.subr.bf16.mxu0 0
    %934 = vmatpush1.bf16.msra.mxu0 0
    %935 = vmatprep.subr.bf16.mxu0 0
    %936 = vmatpush1.bf16.msra.mxu0 0
    %937 = vmatprep.subr.bf16.mxu0 0
    %938 = vmatpush1.bf16.msra.mxu0 0
    %939 = vmatprep.subr.bf16.mxu0 0
    %940 = vmatpush1.bf16.msra.mxu0 0
    %941 = vmatprep.subr.bf16.mxu0 0
    %942 = vmatpush1.bf16.msra.mxu0 0
    %943 = vmatprep.subr.bf16.mxu0 0
    %944 = vmatpush1.bf16.msra.mxu0 0
    %945 = vmatprep.subr.bf16.mxu0 0
    %946 = vmatpush1.bf16.msra.mxu0 0
    %947 = vmatprep.mubr.bf16.mxu0 0
    %948 = vmatmul.mubr.bf16.gmra.mrb[0].mxu0 %v910
    %v949 = vpop.f32.mrb[0].mxu0
    %v950 = vadd.f32 0.0, %v949
    %v951 = vpop.f32.mrb[0].mxu0
    %v952 = vpop.f32.mrb[0].mxu0
    %v953 = vpop.f32.mrb[0].mxu0
    %954 = vdwg.mxu0
    %v955 = vrcp.pop %v853
    %v956 = vrcp.pop %v856
    %v957 = vmul.f32 %v902, %v955
    %v958 = vmul.f32 %v950, %v956
    %v959 = vpack.c.bf16 %v957, %v957
    %v960 = vpack.c.bf16 %v958, %v958
    %961 = vrot.lane.b32.xlu0 %v286, 32
    %v962 = vpop.permute.xlu0 %961
    %963 = vrot.lane.b32.xlu0 %v288, 32
    %v964 = vpop.permute.xlu0 %963
    %v966 = vsel %vm292, %v962, 0
    %v969 = vsel %vm292, %v964, 0
    %971 = vmatprep.subr.bf16.mxu0 0
    %972 = vmatpush1.bf16.xpose.msra.mxu0 %v969
    %973 = vmatprep.subr.bf16.mxu0 0
    %974 = vmatpush1.bf16.xpose.msra.mxu0 0
    %975 = vmatprep.subr.bf16.mxu0 0
    %976 = vmatpush1.bf16.xpose.msra.mxu0 0
    %977 = vmatprep.subr.bf16.mxu0 0
    %978 = vmatpush1.bf16.xpose.msra.mxu0 0
    %979 = vmatprep.subr.bf16.mxu0 0
    %980 = vmatpush1.bf16.xpose.msra.mxu0 0
    %981 = vmatprep.subr.bf16.mxu0 0
    %982 = vmatpush1.bf16.xpose.msra.mxu0 0
    %983 = vmatprep.subr.bf16.mxu0 0
    %984 = vmatpush1.bf16.xpose.msra.mxu0 0
    %985 = vmatprep.subr.bf16.mxu0 0
    %986 = vmatpush1.bf16.xpose.msra.mxu0 0
    %987 = vmatprep.subr.bf16.mxu0 0
    %988 = vmatpush1.bf16.xpose.msra.mxu0 0
    %989 = vmatprep.subr.bf16.mxu0 0
    %990 = vmatpush1.bf16.xpose.msra.mxu0 0
    %991 = vmatprep.subr.bf16.mxu0 0
    %992 = vmatpush1.bf16.xpose.msra.mxu0 0
    %993 = vmatprep.subr.bf16.mxu0 0
    %994 = vmatpush1.bf16.xpose.msra.mxu0 0
    %995 = vmatprep.subr.bf16.mxu0 0
    %996 = vmatpush1.bf16.xpose.msra.mxu0 0
    %997 = vmatprep.subr.bf16.mxu0 0
    %998 = vmatpush1.bf16.xpose.msra.mxu0 0
    %999 = vmatprep.subr.bf16.mxu0 0
    %1000 = vmatpush1.bf16.xpose.msra.mxu0 0
    %1001 = vmatprep.subr.bf16.mxu0 0
    %1002 = vmatpush1.bf16.xpose.msra.mxu0 0
    %1003 = vmatprep.mubr.bf16.mxu0 0
    %1004 = vmatmul.mubr.bf16.gmra.mrb[0].mxu0 %v966
    %v1005 = vpop.f32.mrb[0].mxu0
    %v1006 = vadd.f32 0.0, %v1005
    %v1007 = vpop.f32.mrb[0].mxu0
    %v1008 = vpop.f32.mrb[0].mxu0
    %v1009 = vpop.f32.mrb[0].mxu0
    %1010 = vdwg.mxu0
    %1011 = vrot.lane.b32.xlu0 %v287, 32
    %v1012 = vpop.permute.xlu0 %1011
    %1013 = vrot.lane.b32.xlu0 %v289, 32
    %v1014 = vpop.permute.xlu0 %1013
    %v1016 = vsel %vm292, %v1012, 0
    %v1019 = vsel %vm292, %v1014, 0
    %1021 = vmatprep.subr.bf16.mxu0 0
    %1022 = vmatpush1.bf16.xpose.msra.mxu0 %v1019
    %1023 = vmatprep.subr.bf16.mxu0 0
    %1024 = vmatpush1.bf16.xpose.msra.mxu0 0
    %1025 = vmatprep.subr.bf16.mxu0 0
    %1026 = vmatpush1.bf16.xpose.msra.mxu0 0
    %1027 = vmatprep.subr.bf16.mxu0 0
    %1028 = vmatpush1.bf16.xpose.msra.mxu0 0
    %1029 = vmatprep.subr.bf16.mxu0 0
    %1030 = vmatpush1.bf16.xpose.msra.mxu0 0
    %1031 = vmatprep.subr.bf16.mxu0 0
    %1032 = vmatpush1.bf16.xpose.msra.mxu0 0
    %1033 = vmatprep.subr.bf16.mxu0 0
    %1034 = vmatpush1.bf16.xpose.msra.mxu0 0
    %1035 = vmatprep.subr.bf16.mxu0 0
    %1036 = vmatpush1.bf16.xpose.msra.mxu0 0
    %1037 = vmatprep.subr.bf16.mxu0 0
    %1038 = vmatpush1.bf16.xpose.msra.mxu0 0
    %1039 = vmatprep.subr.bf16.mxu0 0
    %1040 = vmatpush1.bf16.xpose.msra.mxu0 0
    %1041 = vmatprep.subr.bf16.mxu0 0
    %1042 = vmatpush1.bf16.xpose.msra.mxu0 0
    %1043 = vmatprep.subr.bf16.mxu0 0
    %1044 = vmatpush1.bf16.xpose.msra.mxu0 0
    %1045 = vmatprep.subr.bf16.mxu0 0
    %1046 = vmatpush1.bf16.xpose.msra.mxu0 0
    %1047 = vmatprep.subr.bf16.mxu0 0
    %1048 = vmatpush1.bf16.xpose.msra.mxu0 0
    %1049 = vmatprep.subr.bf16.mxu0 0
    %1050 = vmatpush1.bf16.xpose.msra.mxu0 0
    %1051 = vmatprep.subr.bf16.mxu0 0
    %1052 = vmatpush1.bf16.xpose.msra.mxu0 0
    %1053 = vmatprep.mubr.bf16.mxu0 0
    %1054 = vmatmul.mubr.bf16.gmra.mrb[0].mxu0 %v1016
    %v1055 = vpop.f32.mrb[0].mxu0
    %v1056 = vadd.f32 0.0, %v1055
    %v1057 = vpop.f32.mrb[0].mxu0
    %v1058 = vpop.f32.mrb[0].mxu0
    %v1059 = vpop.f32.mrb[0].mxu0
    %1060 = vdwg.mxu0
    %v1061 = vmul.f32 %v1006, 0.17677669
    %v1062 = vmul.f32 %v1056, 0.17677669
    %v1063 = vsel %vm387, %v1061, -inf
    %1064 = vmax.xlane.f32.xlu0 %v1063
    %v1065 = vpop.xlane.xlu0 %1064
    %v1066 = vsel %vm387, %v1062, -inf
    %1067 = vmax.xlane.f32.xlu0 %v1066
    %v1068 = vpop.xlane.xlu0 %1067
    %v1069 = vsub.f32 %v1061, %v1065
    %v1070 = vsub.f32 %v1062, %v1068
    %v1071 = vmul.f32 %v1069, 1.442695
    %v1072 = vpow.pop %v1071
    %v1073 = vmul.f32 %v1070, 1.442695
    %v1074 = vpow.pop %v1073
    %v1075 = vsel %vm387, %v1072, 0.0
    %1076 = vadd.xlane.f32.xlu0 %v1075
    %v1077 = vpop.xlane.xlu0 %1076
    %v1078 = vsel %vm387, %v1074, 0.0
    %1079 = vadd.xlane.f32.xlu0 %v1078
    %v1080 = vpop.xlane.xlu0 %1079
    %v1081 = vpack.c.bf16 %v1072, %v1072
    %v1082 = vpack.c.bf16 %v1074, %v1074
    %1083 = vrot.lane.b32.xlu0 %v290, 32
    %v1084 = vpop.permute.xlu0 %1083
    %v1086 = vsel %vm387, %v1081, 0
    %v1089 = vsel %vm411, %v1084, 0
    %1091 = vmatprep.subr.bf16.mxu0 0
    %1092 = vmatpush1.bf16.msra.mxu0 %v1089
    %1093 = vmatprep.subr.bf16.mxu0 0
    %1094 = vmatpush1.bf16.msra.mxu0 0
    %1095 = vmatprep.subr.bf16.mxu0 0
    %1096 = vmatpush1.bf16.msra.mxu0 0
    %1097 = vmatprep.subr.bf16.mxu0 0
    %1098 = vmatpush1.bf16.msra.mxu0 0
    %1099 = vmatprep.subr.bf16.mxu0 0
    %1100 = vmatpush1.bf16.msra.mxu0 0
    %1101 = vmatprep.subr.bf16.mxu0 0
    %1102 = vmatpush1.bf16.msra.mxu0 0
    %1103 = vmatprep.subr.bf16.mxu0 0
    %1104 = vmatpush1.bf16.msra.mxu0 0
    %1105 = vmatprep.subr.bf16.mxu0 0
    %1106 = vmatpush1.bf16.msra.mxu0 0
    %1107 = vmatprep.subr.bf16.mxu0 0
    %1108 = vmatpush1.bf16.msra.mxu0 0
    %1109 = vmatprep.subr.bf16.mxu0 0
    %1110 = vmatpush1.bf16.msra.mxu0 0
    %1111 = vmatprep.subr.bf16.mxu0 0
    %1112 = vmatpush1.bf16.msra.mxu0 0
    %1113 = vmatprep.subr.bf16.mxu0 0
    %1114 = vmatpush1.bf16.msra.mxu0 0
    %1115 = vmatprep.subr.bf16.mxu0 0
    %1116 = vmatpush1.bf16.msra.mxu0 0
    %1117 = vmatprep.subr.bf16.mxu0 0
    %1118 = vmatpush1.bf16.msra.mxu0 0
    %1119 = vmatprep.subr.bf16.mxu0 0
    %1120 = vmatpush1.bf16.msra.mxu0 0
    %1121 = vmatprep.subr.bf16.mxu0 0
    %1122 = vmatpush1.bf16.msra.mxu0 0
    %1123 = vmatprep.mubr.bf16.mxu0 0
    %1124 = vmatmul.mubr.bf16.gmra.mrb[0].mxu0 %v1086
    %v1125 = vpop.f32.mrb[0].mxu0
    %v1126 = vadd.f32 0.0, %v1125
    %v1127 = vpop.f32.mrb[0].mxu0
    %v1128 = vpop.f32.mrb[0].mxu0
    %v1129 = vpop.f32.mrb[0].mxu0
    %1130 = vdwg.mxu0
    %1131 = vrot.lane.b32.xlu0 %v291, 32
    %v1132 = vpop.permute.xlu0 %1131
    %v1134 = vsel %vm387, %v1082, 0
    %v1137 = vsel %vm411, %v1132, 0
    %1139 = vmatprep.subr.bf16.mxu0 0
    %1140 = vmatpush1.bf16.msra.mxu0 %v1137
    %1141 = vmatprep.subr.bf16.mxu0 0
    %1142 = vmatpush1.bf16.msra.mxu0 0
    %1143 = vmatprep.subr.bf16.mxu0 0
    %1144 = vmatpush1.bf16.msra.mxu0 0
    %1145 = vmatprep.subr.bf16.mxu0 0
    %1146 = vmatpush1.bf16.msra.mxu0 0
    %1147 = vmatprep.subr.bf16.mxu0 0
    %1148 = vmatpush1.bf16.msra.mxu0 0
    %1149 = vmatprep.subr.bf16.mxu0 0
    %1150 = vmatpush1.bf16.msra.mxu0 0
    %1151 = vmatprep.subr.bf16.mxu0 0
    %1152 = vmatpush1.bf16.msra.mxu0 0
    %1153 = vmatprep.subr.bf16.mxu0 0
    %1154 = vmatpush1.bf16.msra.mxu0 0
    %1155 = vmatprep.subr.bf16.mxu0 0
    %1156 = vmatpush1.bf16.msra.mxu0 0
    %1157 = vmatprep.subr.bf16.mxu0 0
    %1158 = vmatpush1.bf16.msra.mxu0 0
    %1159 = vmatprep.subr.bf16.mxu0 0
    %1160 = vmatpush1.bf16.msra.mxu0 0
    %1161 = vmatprep.subr.bf16.mxu0 0
    %1162 = vmatpush1.bf16.msra.mxu0 0
    %1163 = vmatprep.subr.bf16.mxu0 0
    %1164 = vmatpush1.bf16.msra.mxu0 0
    %1165 = vmatprep.subr.bf16.mxu0 0
    %1166 = vmatpush1.bf16.msra.mxu0 0
    %1167 = vmatprep.subr.bf16.mxu0 0
    %1168 = vmatpush1.bf16.msra.mxu0 0
    %1169 = vmatprep.subr.bf16.mxu0 0
    %1170 = vmatpush1.bf16.msra.mxu0 0
    %1171 = vmatprep.mubr.bf16.mxu0 0
    %1172 = vmatmul.mubr.bf16.gmra.mrb[0].mxu0 %v1134
    %v1173 = vpop.f32.mrb[0].mxu0
    %v1174 = vadd.f32 0.0, %v1173
    %v1175 = vpop.f32.mrb[0].mxu0
    %v1176 = vpop.f32.mrb[0].mxu0
    %v1177 = vpop.f32.mrb[0].mxu0
    %1178 = vdwg.mxu0
    %v1179 = vrcp.pop %v1077
    %v1180 = vrcp.pop %v1080
    %v1181 = vmul.f32 %v1126, %v1179
    %v1182 = vmul.f32 %v1174, %v1180
    %v1183 = vpack.c.bf16 %v1181, %v1181
    %v1184 = vpack.c.bf16 %v1182, %v1182
    %1187 = vrot.lane.b32.xlu0 %v735, 32
    %v1188 = vpop.permute.xlu0 %1187
    %1189 = vrot.lane.b32.xlu0 %v736, 32
    %v1190 = vpop.permute.xlu0 %1189
    %1193 = vrot.lane.b32.xlu0 %v959, 64
    %v1194 = vpop.permute.xlu0 %1193
    %1195 = vrot.lane.b32.xlu0 %v960, 64
    %v1196 = vpop.permute.xlu0 %1195
    %1199 = vrot.lane.b32.xlu0 %v1183, 96
    %v1200 = vpop.permute.xlu0 %1199
    %1201 = vrot.lane.b32.xlu0 %v1184, 96
    %v1202 = vpop.permute.xlu0 %1201
    %v1205 = vsel %vm292, %v505, %v1188
    %v1208 = vsel %vm292, %v506, %v1190
    %vm1209 = vcmask 523264
    %v1211 = vsel %vm1209, %v1205, %v1194
    %v1213 = vsel %vm1209, %v1208, %v1196
    %vm1214 = vcmask 785408
    %v1216 = vsel %vm1214, %v1211, %v1200
    %v1218 = vsel %vm1214, %v1213, %v1202
    %v1219 = vld [vmem:[%s3] sm:$0xf]
    %v1220 = vld [vmem:[%s3 + $0x4] sm:$0xf]
    %v1221 = vld [vmem:[%s3 + $0x8] sm:$0xf]
    %v1222 = vld [vmem:[%s3 + $0xc] sm:$0xf]
    %v1223 = vld [vmem:[%s3 + $0x10] sm:$0xf]
    %v1224 = vld [vmem:[%s3 + $0x14] sm:$0xf]
    %v1225 = vld [vmem:[%s3 + $0x18] sm:$0xf]
    %v1226 = vld [vmem:[%s3 + $0x1c] sm:$0xf]
    %v1227 = vld [vmem:[%s3 + $0x20] sm:$0xf]
    %v1228 = vld [vmem:[%s3 + $0x24] sm:$0xf]
    %v1229 = vld [vmem:[%s3 + $0x28] sm:$0xf]
    %v1230 = vld [vmem:[%s3 + $0x2c] sm:$0xf]
    %v1231 = vld [vmem:[%s3 + $0x30] sm:$0xf]
    %v1232 = vld [vmem:[%s3 + $0x34] sm:$0xf]
    %v1233 = vld [vmem:[%s3 + $0x38] sm:$0xf]
    %v1234 = vld [vmem:[%s3 + $0x3c] sm:$0xf]
    %v1235 = vld [vmem:[%s4] sm:$0x1]
    %v1237 = vlaneseq
    %v1238 = vshrl.u32 %v1237, 7
    %v1239 = vsub.s32 0, %v1238
    %v1240 = vrot.slane %v1235, %v1239
    %v1244 = vunpack.c.l.b16 %v1216
    %v1245 = vunpack.c.l.b16 %v1218
    %v1246 = vpack.c.b16 %v1245, %v1244
    %v1264 = vunpack.c.l.b16 %v1219
    %v1265 = vunpack.c.l.b16 %v1220
    %v1266 = vunpack.c.l.b16 %v1221
    %v1267 = vunpack.c.l.b16 %v1222
    %v1268 = vunpack.c.l.b16 %v1223
    %v1269 = vunpack.c.l.b16 %v1224
    %v1270 = vunpack.c.l.b16 %v1225
    %v1271 = vunpack.c.l.b16 %v1226
    %v1272 = vunpack.c.l.b16 %v1227
    %v1273 = vunpack.c.l.b16 %v1228
    %v1274 = vunpack.c.l.b16 %v1229
    %v1275 = vunpack.c.l.b16 %v1230
    %v1276 = vunpack.c.l.b16 %v1231
    %v1277 = vunpack.c.l.b16 %v1232
    %v1278 = vunpack.c.l.b16 %v1233
    %v1279 = vunpack.c.l.b16 %v1234
    %v1280 = vpack.c.b16 %v1265, %v1264
    %v1281 = vpack.c.b16 %v1267, %v1266
    %v1282 = vpack.c.b16 %v1269, %v1268
    %v1283 = vpack.c.b16 %v1271, %v1270
    %v1284 = vpack.c.b16 %v1273, %v1272
    %v1285 = vpack.c.b16 %v1275, %v1274
    %v1286 = vpack.c.b16 %v1277, %v1276
    %v1287 = vpack.c.b16 %v1279, %v1278
    %1296 = vmatprep.subr.bf16.mxu0 0
    %1297 = vmatpush1.bf16.msra.mxu0 %v1280
    %1298 = vmatprep.subr.bf16.mxu0 0
    %1299 = vmatpush1.bf16.msra.mxu0 %v1281
    %1300 = vmatprep.subr.bf16.mxu0 0
    %1301 = vmatpush1.bf16.msra.mxu0 %v1282
    %1302 = vmatprep.subr.bf16.mxu0 0
    %1303 = vmatpush1.bf16.msra.mxu0 %v1283
    %1304 = vmatprep.subr.bf16.mxu0 0
    %1305 = vmatpush1.bf16.msra.mxu0 %v1284
    %1306 = vmatprep.subr.bf16.mxu0 0
    %1307 = vmatpush1.bf16.msra.mxu0 %v1285
    %1308 = vmatprep.subr.bf16.mxu0 0
    %1309 = vmatpush1.bf16.msra.mxu0 %v1286
    %1310 = vmatprep.subr.bf16.mxu0 0
    %1311 = vmatpush1.bf16.msra.mxu0 %v1287
    %1312 = vmatprep.subr.bf16.mxu0 0
    %1313 = vmatpush1.bf16.msra.mxu0 0
    %1314 = vmatprep.subr.bf16.mxu0 0
    %1315 = vmatpush1.bf16.msra.mxu0 0
    %1316 = vmatprep.subr.bf16.mxu0 0
    %1317 = vmatpush1.bf16.msra.mxu0 0
    %1318 = vmatprep.subr.bf16.mxu0 0
    %1319 = vmatpush1.bf16.msra.mxu0 0
    %1320 = vmatprep.subr.bf16.mxu0 0
    %1321 = vmatpush1.bf16.msra.mxu0 0
    %1322 = vmatprep.subr.bf16.mxu0 0
    %1323 = vmatpush1.bf16.msra.mxu0 0
    %1324 = vmatprep.subr.bf16.mxu0 0
    %1325 = vmatpush1.bf16.msra.mxu0 0
    %1326 = vmatprep.subr.bf16.mxu0 0
    %1327 = vmatpush1.bf16.msra.mxu0 0
    %1328 = vmatprep.mubr.bf16.mxu0 0
    %1329 = vmatmul.mubr.bf16.gmra.mrb[0].mxu0 %v1246
    %v1330 = vpop.f32.mrb[0].mxu0
    %v1331 = vadd.f32 %v1240, %v1330
    %v1332 = vpop.f32.mrb[0].mxu0
    %v1333 = vpop.f32.mrb[0].mxu0
    %v1334 = vadd.f32 %v1240, %v1333
    %v1335 = vpop.f32.mrb[0].mxu0
    %1336 = vdwg.mxu0
    %1337 = vst [vmem:[#allocation2] sm:$0xff] %v1331
    %1338 = vst [vmem:[#allocation2 + $0x8] sm:$0xff] %v1334
    // Predicated region
    $region22: #{attention_forward.1} parent=1 // pred_check
      _
    $region23: #{attention_forward.1} parent=1 // pred_check_branch
      %1340 = sbr.rel (0) target = $region25
    $region24: #{attention_forward.1} parent=1 // pred_region
      %s1342 = ssub.s32 256, 256
      %1343 = vsyncadd [#allocation3], %s1342
      %s1344 = sshll.u32 [#allocation2], 4
      %s1345 = int_to_ptr.vmem [resolvable:$true] %s1344
      %1350 = dma.vmem_to_hbm [thread:$0]  %s1345, 256, %s5, [#allocation3], 128, 128, 8
    $region25: #{attention_forward.1} parent=1 // pred_fallthru
      _
    // Predicated region
    $region26: #{attention_forward.1} parent=1 // pred_check
      _
    $region27: #{attention_forward.1} parent=1 // pred_check_branch
      %1352 = sbr.rel (0) target = $region29
    $region28: #{attention_forward.1} parent=1 // pred_region
      %1353 = dma.done [#allocation3], 256
    $region29: #{attention_forward.1} parent=1 // pred_fallthru
      _
    %1354 = vsyncpa [#allocation3], 1

</llo_original>
